<compile_context>
chip_gen: v5e
topology: v5e:2x2
jax: 0.10.0
libtpu: 0.0.40
codegen_flags: <defaults>
</compile_context>

<pallas_src>
import jax
import jax.numpy as jnp
from jax.experimental import pallas as pl
from jax.experimental.pallas import tpu as pltpu

LEAKY_SLOPE = 0.01
BN_EPS = 1e-5


def _round_up(x, m):
    return (x + m - 1) // m * m


# ---------------------------------------------------------------------------
# pltpu.roll direction probe (one-time, eager).  pltpu.roll is expected to
# follow jnp.roll semantics; this guards against rotate-direction convention
# drift across jax versions so the tap shifts stay correct either way.
# ---------------------------------------------------------------------------
_ROLL_IS_JNP = None


def _roll_is_jnp_like():
    return True if _ROLL_IS_JNP is None else _ROLL_IS_JNP


def _probe_roll_direction():
    global _ROLL_IS_JNP
    if _ROLL_IS_JNP is not None:
        return _ROLL_IS_JNP

    def kern(x_ref, o_ref):
        o_ref[...] = pltpu.roll(x_ref[...], shift=1, axis=1)

    x = jnp.tile(jnp.arange(256, dtype=jnp.float32)[None, :], (8, 1))
    try:
        out = pl.pallas_call(
            kern, out_shape=jax.ShapeDtypeStruct((8, 256), jnp.float32))(x)
        # jnp.roll semantics: out[:, 0] == x[:, -1] == 255
        _ROLL_IS_JNP = bool(out[0, 0] == 255.0)
    except Exception:
        _ROLL_IS_JNP = True
    return _ROLL_IS_JNP


# ---------------------------------------------------------------------------
# In-kernel helpers.
# ---------------------------------------------------------------------------
def _leaky(v):
    return jnp.where(v >= 0, v, LEAKY_SLOPE * v)


def _shift(h, dy, dx, idx, col, W, P):
    """Tap extraction on the flattened (C, H*W) layout:
         s[c, r*W + w] = h[c, (r+dy)*W + (w+dx)]  if (r+dy, w+dx) inside image
                         0                        otherwise.
    Implemented as one XLU lane rotation (pltpu.roll) plus a single select;
    `idx` / `col` are hoisted iotas shared by all taps of the kernel."""
    k = dy * W + dx
    if k == 0:
        s = h
    else:
        amt = (-k) % P if _roll_is_jnp_like() else k % P
        s = pltpu.roll(h, shift=amt, axis=1)
    cond = None
    if dy > 0:
        cond = idx < (P - dy * W)
    elif dy < 0:
        cond = idx >= (-dy) * W
    if dx > 0:
        c = col < (W - dx)
        cond = c if cond is None else jnp.logical_and(cond, c)
    elif dx < 0:
        c = col >= (-dx)
        cond = c if cond is None else jnp.logical_and(cond, c)
    if cond is None:
        return s
    return jnp.where(cond, s, 0.0)


# ---------------------------------------------------------------------------
# Kernel A: BN0 + LeakyReLU + Conv2d(3x3, s1, p1) + bias, plus lane-dense
# partial sum / sum-of-squares of dx (for norm_1's batch statistics).
# ---------------------------------------------------------------------------
def _make_conv0_kernel(H, W, Ci_pad, Ch_pad):
    P = H * W

    def kernel(x_ref, p_ref, w_ref, dx_ref, st_ref):
        # x_ref:(1,Ci_pad,P) f32   p_ref:(2*Ci_pad+Ch_pad,1) f32 = [sc0;sh0;b0]
        # w_ref:(Ch_pad,9*Ci_pad) bf16   dx_ref:(1,Ch_pad,P) bf16
        # st_ref:(1,2*Ch_pad,128) f32 = [sum; sumsq] lane-group partials
        pv = p_ref[...]
        sc = pv[0:Ci_pad]
        sh = pv[Ci_pad:2 * Ci_pad]
        b = pv[2 * Ci_pad:]

        h = _leaky(x_ref[0] * sc + sh)                       # fused BN0 + act (f32)

        idx = jax.lax.broadcasted_iota(jnp.int32, (1, P), 1)  # hoisted once
        col = idx % W
        taps = [_shift(h, ky - 1, kx - 1, idx, col, W, P)
                for ky in range(3) for kx in range(3)]
        patches = jnp.concatenate(taps, axis=0).astype(jnp.bfloat16)   # (9*Ci_pad, P)

        acc = jnp.dot(w_ref[...], patches,
                      preferred_element_type=jnp.float32) + b          # (Ch_pad, P) f32
        dx_ref[0] = acc.astype(dx_ref.dtype)

        # Lane-dense stats: reduce P lanes only down to 128 (dense vst), wrapper
        # finishes the reduction.  (E[x^2]-mean^2 kept; sums stay f32.)
        blk = acc[:, 0:128]
        ssum = blk
        ssq = blk * blk
        for g in range(1, P // 128):
            blk = acc[:, g * 128:(g + 1) * 128]
            ssum = ssum + blk
            ssq = ssq + blk * blk
        st_ref[0] = jnp.concatenate([ssum, ssq], axis=0)               # (2*Ch_pad, 128)

    return kernel


def _conv0_call(xp, params_a, w0, H, W):
    N, Ci_pad, P = xp.shape
    Ch_pad, Ka = w0.shape
    Ra = params_a.shape[0]
    flops = 2 * N * Ch_pad * Ka * P
    bytes_accessed = (xp.size * 4 + w0.size * 2 + Ra * 4
                      + N * Ch_pad * P * 2 + N * 2 * Ch_pad * 128 * 4)
    return pl.pallas_call(
        _make_conv0_kernel(H, W, Ci_pad, Ch_pad),
        out_shape=(jax.ShapeDtypeStruct((N, Ch_pad, P), jnp.bfloat16),
                   jax.ShapeDtypeStruct((N, 2 * Ch_pad, 128), jnp.float32)),
        grid_spec=pltpu.PrefetchScalarGridSpec(
            num_scalar_prefetch=0,
            grid=(N,),
            in_specs=[
                pl.BlockSpec((1, Ci_pad, P), lambda n: (n, 0, 0)),
                pl.BlockSpec((Ra, 1), lambda n: (0, 0)),
                pl.BlockSpec((Ch_pad, Ka), lambda n: (0, 0)),
            ],
            out_specs=(
                pl.BlockSpec((1, Ch_pad, P), lambda n: (n, 0, 0)),
                pl.BlockSpec((1, 2 * Ch_pad, 128), lambda n: (n, 0, 0)),
            ),
        ),
        compiler_params=pltpu.CompilerParams(
            dimension_semantics=("parallel",),
            vmem_limit_bytes=32 * 1024 * 1024),
        cost_estimate=pl.CostEstimate(flops=flops, transcendentals=0,
                                      bytes_accessed=bytes_accessed),
    )(xp, params_a, w0)


# ---------------------------------------------------------------------------
# Kernel B: BN_s/BN_1 + LeakyReLU + both ConvTranspose2d (polyphase) + residual
# add, folded into ONE matmul (the two branches are concatenated along K).
# Output rows are [ee, eo, oe, oo] phase blocks of Co_pad channels each.
# ---------------------------------------------------------------------------
def _make_up_kernel(H, W, C_cat, M):
    P = H * W

    def kernel(x_ref, dx_ref, p_ref, w_ref, o_ref):
        # x_ref:(1,Ci_pad,P) f32   dx_ref:(1,Ch_pad,P) bf16
        # p_ref:(2*C_cat+M,1) f32 = [scale_cat; shift_cat; bias]
        # w_ref:(M,4*C_cat) bf16   o_ref:(1,M,P) f32
        pv = p_ref[...]
        sc = pv[0:C_cat]
        sh = pv[C_cat:2 * C_cat]
        b = pv[2 * C_cat:]

        xin = jnp.concatenate([x_ref[0], dx_ref[0].astype(jnp.float32)], axis=0)
        h = _leaky(xin * sc + sh)                             # fused BN_s / BN_1 + act

        idx = jax.lax.broadcasted_iota(jnp.int32, (1, P), 1)  # hoisted once
        col = idx % W
        taps = [_shift(h, dy, dx, idx, col, W, P) for dy in (0, 1) for dx in (0, 1)]
        patches = jnp.concatenate(taps, axis=0).astype(jnp.bfloat16)    # (4*C_cat, P)

        out = jnp.dot(w_ref[...], patches,
                      preferred_element_type=jnp.float32) + b
        o_ref[0] = out.astype(o_ref.dtype)

    return kernel


def _upsample_call(xp, dxp, params_b, w_up, H, W):
    N, Ci_pad, P = xp.shape
    Ch_pad = dxp.shape[1]
    M, Kb = w_up.shape
    C_cat = Ci_pad + Ch_pad
    Rb = params_b.shape[0]
    flops = 2 * N * M * Kb * P
    bytes_accessed = (xp.size * 4 + dxp.size * 2 + w_up.size * 2 + Rb * 4
                      + N * M * P * 4)
    return pl.pallas_call(
        _make_up_kernel(H, W, C_cat, M),
        out_shape=jax.ShapeDtypeStruct((N, M, P), jnp.float32),
        grid_spec=pltpu.PrefetchScalarGridSpec(
            num_scalar_prefetch=0,
            grid=(N,),
            in_specs=[
                pl.BlockSpec((1, Ci_pad, P), lambda n: (n, 0, 0)),
                pl.BlockSpec((1, Ch_pad, P), lambda n: (n, 0, 0)),
                pl.BlockSpec((Rb, 1), lambda n: (0, 0)),
                pl.BlockSpec((M, Kb), lambda n: (0, 0)),
            ],
            out_specs=pl.BlockSpec((1, M, P), lambda n: (n, 0, 0)),
        ),
        compiler_params=pltpu.CompilerParams(
            dimension_semantics=("parallel",),
            vmem_limit_bytes=32 * 1024 * 1024),
        cost_estimate=pl.CostEstimate(flops=flops, transcendentals=0,
                                      bytes_accessed=bytes_accessed),
    )(xp, dxp, params_b, w_up)


# ---------------------------------------------------------------------------
# One-time, parameter-only preprocessing (hoisted out of the per-call path).
# ---------------------------------------------------------------------------
def _pad1(v, n):
    v = jnp.asarray(v, jnp.float32)
    return jnp.pad(v, (0, n - v.shape[0]))


def _pack_conv0_weight(w_oihw, Ci_pad, Ch_pad):
    """(Ch, Ci, 3, 3) OIHW -> bf16 (Ch_pad, 9*Ci_pad), columns ordered (ky, kx, ci)."""
    Ch, Ci = w_oihw.shape[0], w_oihw.shape[1]
    wp = jnp.zeros((Ch_pad, 3, 3, Ci_pad), jnp.float32)
    wp = wp.at[:Ch, :, :, :Ci].set(jnp.transpose(w_oihw, (0, 2, 3, 1)))
    return wp.reshape(Ch_pad, 9 * Ci_pad).astype(jnp.bfloat16)


# ConvTranspose(k=3, s=2, p=1, op=1): output index o = 2*i - 1 + k.
# (output parity, input offset dy) -> kernel tap ky (None = no contribution).
_PHASE_TAP = {(0, 0): 1, (1, 0): 2, (1, 1): 0}


def _pack_up_weight(ws_iohw, w1_iohw, Ci_pad, Ch_pad, Co_pad):
    """Fused polyphase weight bf16 (4*Co_pad, 4*(Ci_pad+Ch_pad)) for conv_s+conv_1.
    Row blocks: phases [ee, eo, oe, oo]; column blocks: taps (dy,dx) in
    [(0,0),(0,1),(1,0),(1,1)] matching the kernel's patch order."""
    Ci, Co = ws_iohw.shape[0], ws_iohw.shape[1]
    Ch = w1_iohw.shape[0]
    C_cat = Ci_pad + Ch_pad
    wc = jnp.zeros((C_cat, Co_pad, 3, 3), jnp.float32)
    wc = wc.at[:Ci, :Co].set(ws_iohw)
    wc = wc.at[Ci_pad:Ci_pad + Ch, :Co].set(w1_iohw)
    rows = []
    for pr in (0, 1):
        for pc in (0, 1):
            blocks = []
            for dy in (0, 1):
                for dx in (0, 1):
                    ky = _PHASE_TAP.get((pr, dy))
                    kx = _PHASE_TAP.get((pc, dx))
                    if ky is None or kx is None:
                        blocks.append(jnp.zeros((Co_pad, C_cat), jnp.float32))
                    else:
                        blocks.append(wc[:, :, ky, kx].T)
            rows.append(jnp.concatenate(blocks, axis=1))   # (Co_pad, 4*C_cat)
    return jnp.concatenate(rows, axis=0).astype(jnp.bfloat16)


def prepare_params(p):
    _probe_roll_direction()
    Ch, Ci = p["conv_0_w"].shape[0], p["conv_0_w"].shape[1]
    Co = p["conv_1_w"].shape[1]
    Ci_pad, Ch_pad, Co_pad = _round_up(Ci, 8), _round_up(Ch, 8), _round_up(Co, 2)
    return {
        "w0": _pack_conv0_weight(p["conv_0_w"], Ci_pad, Ch_pad),
        "b0": _pad1(p["conv_0_b"], Ch_pad),
        "w_up": _pack_up_weight(p["conv_s_w"], p["conv_1_w"], Ci_pad, Ch_pad, Co_pad),
        "b_up": jnp.tile(_pad1(p["conv_s_b"] + p["conv_1_b"], Co_pad), 4),
        "g0": _pad1(p["norm_0_gamma"], Ci_pad), "be0": _pad1(p["norm_0_beta"], Ci_pad),
        "gs": _pad1(p["norm_s_gamma"], Ci_pad), "bes": _pad1(p["norm_s_beta"], Ci_pad),
        "g1": _pad1(p["norm_1_gamma"], Ch_pad), "be1": _pad1(p["norm_1_beta"], Ch_pad),
    }


# ---------------------------------------------------------------------------
# Forward pass (NCHW in -> NCHW out), matching PyTorch training-mode BN.
# ---------------------------------------------------------------------------
def resblock_forward(x, prep, *, out_nc):
    N, Ci, H, W = x.shape
    P = H * W
    assert P % 128 == 0, "H*W must be a multiple of 128 (lane-dense stats path)"
    Ci_pad = prep["g0"].shape[0]
    Ch_pad = prep["g1"].shape[0]
    Co_pad = prep["b_up"].shape[0] // 4

    xr = x.reshape(N, Ci, P)            # channels -> sublanes, pixels -> lanes

    # Batch stats of x (shared by norm_0 / norm_s; biased variance, training
    # mode).  Two-pass form to avoid E[x^2]-E[x]^2 cancellation.
    mean_x = jnp.mean(xr, axis=(0, 2))
    var_x = jnp.mean(jnp.square(xr - mean_x[None, :, None]), axis=(0, 2))
    inv_x = jax.lax.rsqrt(var_x + BN_EPS)
    pad_i = lambda v: jnp.pad(v, (0, Ci_pad - Ci))
    inv_xp, mean_xp = pad_i(inv_x), pad_i(mean_x)
    sc0 = prep["g0"] * inv_xp
    sh0 = prep["be0"] - mean_xp * sc0
    scs = prep["gs"] * inv_xp
    shs = prep["bes"] - mean_xp * scs

    xp = xr if Ci_pad == Ci else jnp.pad(xr, ((0, 0), (0, Ci_pad - Ci), (0, 0)))

    # Kernel A: fused BN0 + LeakyReLU + conv_0 (+ bias), plus dx stats partials.
    params_a = jnp.concatenate([sc0, sh0, prep["b0"]]).reshape(-1, 1)
    dxp, stats = _conv0_call(xp, params_a, prep["w0"], H, W)

    cnt = N * P
    tot = jnp.sum(stats, axis=(0, 2))                  # (2*Ch_pad,)
    mean1 = tot[:Ch_pad] / cnt
    var1 = jnp.maximum(tot[Ch_pad:] / cnt - jnp.square(mean1), 0.0)
    sc1 = prep["g1"] * jax.lax.rsqrt(var1 + BN_EPS)
    sh1 = prep["be1"] - mean1 * sc1

    # Kernel B: fused BN_s/BN_1 + LeakyReLU + both transposed convs + residual.
    params_b = jnp.concatenate([scs, sc1, shs, sh1, prep["b_up"]]).reshape(-1, 1)
    phases = _upsample_call(xp, dxp, params_b, prep["w_up"], H, W)  # (N, 4*Co_pad, P)

    # TODO(synk): fuse this phase de-interleave into kernel B (strided / XLU
    # interleaved stores) to avoid one extra HBM round trip of the output.
    o = phases.reshape(N, 2, 2, Co_pad, H, W)[:, :, :, :out_nc]     # (n,pr,pc,co,h,w)
    o = jnp.transpose(o, (0, 3, 4, 1, 5, 2))                        # (n,co,h,pr,w,pc)
    return o.reshape(N, out_nc, 2 * H, 2 * W)


# ---------------------------------------------------------------------------
# Pure-JAX reference (XLA convs) for correctness checking.
# ---------------------------------------------------------------------------
def resblock_reference(x, p):
    def bn_leaky(x, g, b):
        mean = jnp.mean(x, axis=(0, 2, 3), keepdims=True)
        var = jnp.mean((x - mean) ** 2, axis=(0, 2, 3), keepdims=True)
        y = (x - mean) / jnp.sqrt(var + BN_EPS) * g.reshape(1, -1, 1, 1) \
            + b.reshape(1, -1, 1, 1)
        return jnp.where(y >= 0, y, LEAKY_SLOPE * y)

    def conv(x, w, b):
        y = jax.lax.conv_general_dilated(
            x, w, (1, 1), ((1, 1), (1, 1)),
            dimension_numbers=("NCHW", "OIHW", "NCHW"),
            precision=jax.lax.Precision.HIGHEST)
        return y + b.reshape(1, -1, 1, 1)

    def convT(x, w_io, b):
        w = jnp.transpose(w_io[:, :, ::-1, ::-1], (1, 0, 2, 3))
        y = jax.lax.conv_general_dilated(
            x, w, (1, 1), ((1, 2), (1, 2)), lhs_dilation=(2, 2),
            dimension_numbers=("NCHW", "OIHW", "NCHW"),
            precision=jax.lax.Precision.HIGHEST)
        return y + b.reshape(1, -1, 1, 1)

    x_s = convT(bn_leaky(x, p["norm_s_gamma"], p["norm_s_beta"]),
                p["conv_s_w"], p["conv_s_b"])
    dx = conv(bn_leaky(x, p["norm_0_gamma"], p["norm_0_beta"]),
              p["conv_0_w"], p["conv_0_b"])
    dx = convT(bn_leaky(dx, p["norm_1_gamma"], p["norm_1_beta"]),
               p["conv_1_w"], p["conv_1_b"])
    return x_s + dx


# ---------------------------------------------------------------------------
# Deterministic parameter construction (shapes from ResBlock.__init__).
# ---------------------------------------------------------------------------
def init_params(key, input_nc, output_nc, hidden_nc):
    ks = jax.random.split(key, 8)
    return {
        # conv_0: nn.Conv2d(input_nc, hidden_nc, 3, 1, 1) -> (O, I, kh, kw)
        "conv_0_w": 0.1 * jax.random.normal(ks[0], (hidden_nc, input_nc, 3, 3), jnp.float32),
        "conv_0_b": 0.1 * jax.random.normal(ks[1], (hidden_nc,), jnp.float32),
        # conv_1: nn.ConvTranspose2d(hidden_nc, output_nc, 3, 2, 1, 1) -> (I, O, kh, kw)
        "conv_1_w": 0.1 * jax.random.normal(ks[2], (hidden_nc, output_nc, 3, 3), jnp.float32),
        "conv_1_b": 0.1 * jax.random.normal(ks[3], (output_nc,), jnp.float32),
        # conv_s: nn.ConvTranspose2d(input_nc, output_nc, 3, 2, 1, 1) -> (I, O, kh, kw)
        "conv_s_w": 0.1 * jax.random.normal(ks[4], (input_nc, output_nc, 3, 3), jnp.float32),
        "conv_s_b": 0.1 * jax.random.normal(ks[5], (output_nc,), jnp.float32),
        # BatchNorm2d affine params (PyTorch default init: weight=1, bias=0)
        "norm_0_gamma": jnp.ones((input_nc,), jnp.float32),
        "norm_0_beta": jnp.zeros((input_nc,), jnp.float32),
        "norm_1_gamma": jnp.ones((hidden_nc,), jnp.float32),
        "norm_1_beta": jnp.zeros((hidden_nc,), jnp.float32),
        "norm_s_gamma": jnp.ones((input_nc,), jnp.float32),
        "norm_s_beta": jnp.zeros((input_nc,), jnp.float32),
    }


if __name__ == "__main__":
    input_nc, hidden_nc, output_nc = 4, 8, 4
    N, H, W = 2, 16, 16

    key = jax.random.PRNGKey(0)
    kx, kp = jax.random.split(key)
    x = jax.random.normal(kx, (N, input_nc, H, W), jnp.float32)
    params = init_params(kp, input_nc, output_nc, hidden_nc)

    prep = prepare_params(params)            # one-time (runs the roll probe too)
    fwd = jax.jit(lambda xx, pp: resblock_forward(xx, pp, out_nc=output_nc))

    out = jax.block_until_ready(fwd(x, prep))
    assert out.shape == (N, output_nc, 2 * H, 2 * W), out.shape

    ref = jax.block_until_ready(resblock_reference(x, params))
    assert jnp.allclose(out, ref, rtol=2e-2, atol=2e-2), (
        float(jnp.max(jnp.abs(out - ref))))

    print("KERNEL_OK")
</pallas_src>

<mosaic_0001>
module attributes {stable_mosaic.version = 11 : i64} {
  func.func @kern(%arg0: memref<8x256xf32, #tpu.memory_space<vmem>>, %arg1: memref<8x256xf32, #tpu.memory_space<vmem>>) attributes {dimension_semantics = [], scalar_prefetch = 0 : i64, scratch_operands = 0 : i64, tpu.core_type = #tpu.core_type<tc>} {
    %c0 = arith.constant 0 : index
    %c0_0 = arith.constant 0 : index
    %0 = vector.load %arg0[%c0, %c0_0] : memref<8x256xf32, #tpu.memory_space<vmem>>, vector<8x256xf32>
    %c1_i32 = arith.constant 1 : i32
    %1 = tpu.dynamic_rotate %0 by %c1_i32 dim 1 : vector<8x256xf32>, i32 -> vector<8x256xf32>
    %c0_1 = arith.constant 0 : index
    %c0_2 = arith.constant 0 : index
    %2 = vector.load %arg1[%c0_1, %c0_2] : memref<8x256xf32, #tpu.memory_space<vmem>>, vector<8x256xf32>
    tpu.vector_store %arg1[%c0_1, %c0_2], %1 {strides = array<i32>} : memref<8x256xf32, #tpu.memory_space<vmem>>, vector<8x256xf32>,
    return
  }
}

module attributes {stable_mosaic.version = 11 : i64} {
  func.func @kernel(%arg0: i32, %arg1: memref<1x8x256xf32, #tpu.memory_space<vmem>>, %arg2: memref<1x8x256xbf16, #tpu.memory_space<vmem>>, %arg3: memref<48x1xf32, #tpu.memory_space<vmem>>, %arg4: memref<16x64xbf16, #tpu.memory_space<vmem>>, %arg5: memref<1x16x256xf32, #tpu.memory_space<vmem>>) attributes {dimension_semantics = [#tpu.dimension_semantics<parallel>], iteration_bounds = array<i64: 2>, scalar_prefetch = 0 : i64, scratch_operands = 0 : i64, tpu.core_type = #tpu.core_type<tc>, window_params = [{transform_indices = @transform_0, window_bounds = array<i64: 1, 8, 256>}, {transform_indices = @transform_1, window_bounds = array<i64: 1, 8, 256>}, {pipeline_mode = #tpu.pipeline_mode<synchronous>, transform_indices = @transform_2, window_bounds = array<i64: 48, 1>}, {pipeline_mode = #tpu.pipeline_mode<synchronous>, transform_indices = @transform_3, window_bounds = array<i64: 16, 64>}, {transform_indices = @transform_4, window_bounds = array<i64: 1, 16, 256>}]} {
    %c0 = arith.constant 0 : index
    %c0_0 = arith.constant 0 : index
    %0 = vector.load %arg3[%c0, %c0_0] : memref<48x1xf32, #tpu.memory_space<vmem>>, vector<48x1xf32>
    %1 = vector.extract_strided_slice %0 {offsets = [0, 0], sizes = [16, 1], strides = [1, 1]} : vector<48x1xf32> to vector<16x1xf32>
    %2 = vector.extract_strided_slice %0 {offsets = [16, 0], sizes = [16, 1], strides = [1, 1]} : vector<48x1xf32> to vector<16x1xf32>
    %3 = vector.extract_strided_slice %0 {offsets = [32, 0], sizes = [16, 1], strides = [1, 1]} : vector<48x1xf32> to vector<16x1xf32>
    %c0_1 = arith.constant 0 : index
    %c0_2 = arith.constant 0 : index
    %c0_3 = arith.constant 0 : index
    %4 = vector.load %arg1[%c0_1, %c0_2, %c0_3] : memref<1x8x256xf32, #tpu.memory_space<vmem>>, vector<1x8x256xf32>
    %5 = vector.shape_cast %4 : vector<1x8x256xf32> to vector<8x256xf32>
    %c0_4 = arith.constant 0 : index
    %c0_5 = arith.constant 0 : index
    %c0_6 = arith.constant 0 : index
    %6 = vector.load %arg2[%c0_4, %c0_5, %c0_6] : memref<1x8x256xbf16, #tpu.memory_space<vmem>>, vector<1x8x256xbf16>
    %7 = vector.shape_cast %6 : vector<1x8x256xbf16> to vector<8x256xbf16>
    %8 = arith.extf %7 : vector<8x256xbf16> to vector<8x256xf32>
    %9 = tpu.concatenate %5, %8 in 0 : vector<8x256xf32>, vector<8x256xf32> -> vector<16x256xf32>
    %10 = vector.broadcast %1 : vector<16x1xf32> to vector<16x256xf32>
    %11 = arith.mulf %9, %10 : vector<16x256xf32>
    %12 = vector.broadcast %2 : vector<16x1xf32> to vector<16x256xf32>
    %13 = arith.addf %11, %12 : vector<16x256xf32>
    %cst = arith.constant 0.000000e+00 : f32
    %14 = vector.broadcast %cst : f32 to vector<16x256xf32>
    %15 = arith.cmpf oge, %13, %14 : vector<16x256xf32>
    %cst_7 = arith.constant 0.00999999977 : f32
    %16 = vector.broadcast %cst_7 : f32 to vector<16x256xf32>
    %17 = arith.mulf %16, %13 : vector<16x256xf32>
    %18 = arith.select %15, %13, %17 : vector<16x256xi1>, vector<16x256xf32>
    %19 = tpu.iota {dimensions = array<i32: 1>} : vector<1x256xi32>
    %c16_i32 = arith.constant 16 : i32
    %c0_i32 = arith.constant 0 : i32
    %20 = arith.cmpi eq, %c16_i32, %c0_i32 : i32
    %c1_i32 = arith.constant 1 : i32
    %21 = arith.select %20, %c1_i32, %c16_i32 : i32
    %22 = vector.broadcast %21 : i32 to vector<1x256xi32>
    %23 = arith.remsi %19, %22 : vector<1x256xi32>
    %c0_i32_8 = arith.constant 0 : i32
    %24 = vector.broadcast %c0_i32_8 : i32 to vector<1x256xi32>
    %25 = arith.cmpi ne, %23, %24 : vector<1x256xi32>
    %c0_i32_9 = arith.constant 0 : i32
    %26 = vector.broadcast %c0_i32_9 : i32 to vector<1x256xi32>
    %27 = arith.cmpi slt, %23, %26 : vector<1x256xi32>
    %c0_i32_10 = arith.constant 0 : i32
    %28 = arith.cmpi slt, %21, %c0_i32_10 : i32
    %29 = vector.broadcast %28 : i1 to vector<1x256xi1>
    %30 = vector.broadcast %29 : vector<1x256xi1> to vector<1x256xi1>
    %31 = arith.xori %27, %30 : vector<1x256xi1>
    %32 = arith.andi %31, %25 : vector<1x256xi1>
    %33 = vector.broadcast %21 : i32 to vector<1x256xi32>
    %34 = arith.addi %23, %33 : vector<1x256xi32>
    %35 = arith.select %32, %34, %23 : vector<1x256xi1>, vector<1x256xi32>
    %c255_i32 = arith.constant 255 : i32
    %36 = tpu.dynamic_rotate %18 by %c255_i32 dim 1 : vector<16x256xf32>, i32 -> vector<16x256xf32>
    %c15_i32 = arith.constant 15 : i32
    %37 = vector.broadcast %c15_i32 : i32 to vector<1x256xi32>
    %38 = arith.cmpi slt, %35, %37 : vector<1x256xi32>
    %cst_11 = arith.constant 0.000000e+00 : f32
    %39 = vector.shape_cast %38 : vector<1x256xi1> to vector<1x256xi1>
    %40 = vector.broadcast %39 : vector<1x256xi1> to vector<16x256xi1>
    %41 = vector.broadcast %cst_11 : f32 to vector<16x256xf32>
    %42 = arith.select %40, %36, %41 : vector<16x256xi1>, vector<16x256xf32>
    %c240_i32 = arith.constant 240 : i32
    %43 = tpu.dynamic_rotate %18 by %c240_i32 dim 1 : vector<16x256xf32>, i32 -> vector<16x256xf32>
    %c240_i32_12 = arith.constant 240 : i32
    %44 = vector.broadcast %c240_i32_12 : i32 to vector<1x256xi32>
    %45 = arith.cmpi slt, %19, %44 : vector<1x256xi32>
    %cst_13 = arith.constant 0.000000e+00 : f32
    %46 = vector.shape_cast %45 : vector<1x256xi1> to vector<1x256xi1>
    %47 = vector.broadcast %46 : vector<1x256xi1> to vector<16x256xi1>
    %48 = vector.broadcast %cst_13 : f32 to vector<16x256xf32>
    %49 = arith.select %47, %43, %48 : vector<16x256xi1>, vector<16x256xf32>
    %c239_i32 = arith.constant 239 : i32
    %50 = tpu.dynamic_rotate %18 by %c239_i32 dim 1 : vector<16x256xf32>, i32 -> vector<16x256xf32>
    %c240_i32_14 = arith.constant 240 : i32
    %51 = vector.broadcast %c240_i32_14 : i32 to vector<1x256xi32>
    %52 = arith.cmpi slt, %19, %51 : vector<1x256xi32>
    %c15_i32_15 = arith.constant 15 : i32
    %53 = vector.broadcast %c15_i32_15 : i32 to vector<1x256xi32>
    %54 = arith.cmpi slt, %35, %53 : vector<1x256xi32>
    %55 = arith.andi %52, %54 : vector<1x256xi1>
    %cst_16 = arith.constant 0.000000e+00 : f32
    %56 = vector.shape_cast %55 : vector<1x256xi1> to vector<1x256xi1>
    %57 = vector.broadcast %56 : vector<1x256xi1> to vector<16x256xi1>
    %58 = vector.broadcast %cst_16 : f32 to vector<16x256xf32>
    %59 = arith.select %57, %50, %58 : vector<16x256xi1>, vector<16x256xf32>
    %60 = tpu.concatenate %18, %42, %49, %59 in 0 : vector<16x256xf32>, vector<16x256xf32>, vector<16x256xf32>, vector<16x256xf32> -> vector<64x256xf32>
    %61 = arith.truncf %60 : vector<64x256xf32> to vector<64x256xbf16>
    %c0_17 = arith.constant 0 : index
    %c0_18 = arith.constant 0 : index
    %62 = vector.load %arg4[%c0_17, %c0_18] : memref<16x64xbf16, #tpu.memory_space<vmem>>, vector<16x64xbf16>
    %cst_19 = arith.constant dense<0.000000e+00> : vector<16x256xf32>
    %63 = tpu.matmul %62, %61, %cst_19 {dimension_numbers = #tpu.dot_dimension_numbers<[1], [0], [0], [1], [0, 0, 1, 1], [], []>} : vector<16x64xbf16>, vector<64x256xbf16>, vector<16x256xf32> -> vector<16x256xf32>
    %64 = vector.broadcast %3 : vector<16x1xf32> to vector<16x256xf32>
    %65 = arith.addf %63, %64 : vector<16x256xf32>
    %c0_20 = arith.constant 0 : index
    %c0_21 = arith.constant 0 : index
    %c0_22 = arith.constant 0 : index
    %66 = vector.load %arg5[%c0_20, %c0_21, %c0_22] : memref<1x16x256xf32, #tpu.memory_space<vmem>>, vector<1x16x256xf32>
    %67 = vector.shape_cast %66 : vector<1x16x256xf32> to vector<16x256xf32>
    %68 = vector.shape_cast %65 : vector<16x256xf32> to vector<1x16x256xf32>
    tpu.vector_store %arg5[%c0_20, %c0_21, %c0_22], %68 {strides = array<i32>} : memref<1x16x256xf32, #tpu.memory_space<vmem>>, vector<1x16x256xf32>,
    return
  }
  func.func @transform_0(%arg0: i32) -> (i32, i32, i32) {
    %c0_i32 = arith.constant 0 : i32
    %c0_i32_0 = arith.constant 0 : i32
    %c0_i32_1 = arith.constant 0 : i32
    return %arg0, %c0_i32, %c0_i32_0 : i32, i32, i32
  }
  func.func @transform_1(%arg0: i32) -> (i32, i32, i32) {
    %c0_i32 = arith.constant 0 : i32
    %c0_i32_0 = arith.constant 0 : i32
    %c0_i32_1 = arith.constant 0 : i32
    return %arg0, %c0_i32, %c0_i32_0 : i32, i32, i32
  }
  func.func @transform_2(%arg0: i32) -> (i32, i32) {
    %c0_i32 = arith.constant 0 : i32
    %c0_i32_0 = arith.constant 0 : i32
    %c0_i32_1 = arith.constant 0 : i32
    return %c0_i32, %c0_i32_0 : i32, i32
  }
  func.func @transform_3(%arg0: i32) -> (i32, i32) {
    %c0_i32 = arith.constant 0 : i32
    %c0_i32_0 = arith.constant 0 : i32
    %c0_i32_1 = arith.constant 0 : i32
    return %c0_i32, %c0_i32_0 : i32, i32
  }
  func.func @transform_4(%arg0: i32) -> (i32, i32, i32) {
    %c0_i32 = arith.constant 0 : i32
    %c0_i32_0 = arith.constant 0 : i32
    %c0_i32_1 = arith.constant 0 : i32
    return %arg0, %c0_i32, %c0_i32_0 : i32, i32, i32
  }
}

module attributes {stable_mosaic.version = 11 : i64} {
  func.func @kernel(%arg0: i32, %arg1: memref<1x8x256xf32, #tpu.memory_space<vmem>>, %arg2: memref<24x1xf32, #tpu.memory_space<vmem>>, %arg3: memref<8x72xbf16, #tpu.memory_space<vmem>>, %arg4: memref<1x8x256xbf16, #tpu.memory_space<vmem>>, %arg5: memref<1x16x128xf32, #tpu.memory_space<vmem>>) attributes {dimension_semantics = [#tpu.dimension_semantics<parallel>], iteration_bounds = array<i64: 2>, scalar_prefetch = 0 : i64, scratch_operands = 0 : i64, tpu.core_type = #tpu.core_type<tc>, window_params = [{transform_indices = @transform_0, window_bounds = array<i64: 1, 8, 256>}, {pipeline_mode = #tpu.pipeline_mode<synchronous>, transform_indices = @transform_1, window_bounds = array<i64: 24, 1>}, {pipeline_mode = #tpu.pipeline_mode<synchronous>, transform_indices = @transform_2, window_bounds = array<i64: 8, 72>}, {transform_indices = @transform_3, window_bounds = array<i64: 1, 8, 256>}, {transform_indices = @transform_4, window_bounds = array<i64: 1, 16, 128>}]} {
    %c0 = arith.constant 0 : index
    %c0_0 = arith.constant 0 : index
    %0 = vector.load %arg2[%c0, %c0_0] : memref<24x1xf32, #tpu.memory_space<vmem>>, vector<24x1xf32>
    %1 = vector.extract_strided_slice %0 {offsets = [0, 0], sizes = [8, 1], strides = [1, 1]} : vector<24x1xf32> to vector<8x1xf32>
    %2 = vector.extract_strided_slice %0 {offsets = [8, 0], sizes = [8, 1], strides = [1, 1]} : vector<24x1xf32> to vector<8x1xf32>
    %3 = vector.extract_strided_slice %0 {offsets = [16, 0], sizes = [8, 1], strides = [1, 1]} : vector<24x1xf32> to vector<8x1xf32>
    %c0_1 = arith.constant 0 : index
    %c0_2 = arith.constant 0 : index
    %c0_3 = arith.constant 0 : index
    %4 = vector.load %arg1[%c0_1, %c0_2, %c0_3] : memref<1x8x256xf32, #tpu.memory_space<vmem>>, vector<1x8x256xf32>
    %5 = vector.shape_cast %4 : vector<1x8x256xf32> to vector<8x256xf32>
    %6 = vector.broadcast %1 : vector<8x1xf32> to vector<8x256xf32>
    %7 = arith.mulf %5, %6 : vector<8x256xf32>
    %8 = vector.broadcast %2 : vector<8x1xf32> to vector<8x256xf32>
    %9 = arith.addf %7, %8 : vector<8x256xf32>
    %cst = arith.constant 0.000000e+00 : f32
    %10 = vector.broadcast %cst : f32 to vector<8x256xf32>
    %11 = arith.cmpf oge, %9, %10 : vector<8x256xf32>
    %cst_4 = arith.constant 0.00999999977 : f32
    %12 = vector.broadcast %cst_4 : f32 to vector<8x256xf32>
    %13 = arith.mulf %12, %9 : vector<8x256xf32>
    %14 = arith.select %11, %9, %13 : vector<8x256xi1>, vector<8x256xf32>
    %15 = tpu.iota {dimensions = array<i32: 1>} : vector<1x256xi32>
    %c16_i32 = arith.constant 16 : i32
    %c0_i32 = arith.constant 0 : i32
    %16 = arith.cmpi eq, %c16_i32, %c0_i32 : i32
    %c1_i32 = arith.constant 1 : i32
    %17 = arith.select %16, %c1_i32, %c16_i32 : i32
    %18 = vector.broadcast %17 : i32 to vector<1x256xi32>
    %19 = arith.remsi %15, %18 : vector<1x256xi32>
    %c0_i32_5 = arith.constant 0 : i32
    %20 = vector.broadcast %c0_i32_5 : i32 to vector<1x256xi32>
    %21 = arith.cmpi ne, %19, %20 : vector<1x256xi32>
    %c0_i32_6 = arith.constant 0 : i32
    %22 = vector.broadcast %c0_i32_6 : i32 to vector<1x256xi32>
    %23 = arith.cmpi slt, %19, %22 : vector<1x256xi32>
    %c0_i32_7 = arith.constant 0 : i32
    %24 = arith.cmpi slt, %17, %c0_i32_7 : i32
    %25 = vector.broadcast %24 : i1 to vector<1x256xi1>
    %26 = vector.broadcast %25 : vector<1x256xi1> to vector<1x256xi1>
    %27 = arith.xori %23, %26 : vector<1x256xi1>
    %28 = arith.andi %27, %21 : vector<1x256xi1>
    %29 = vector.broadcast %17 : i32 to vector<1x256xi32>
    %30 = arith.addi %19, %29 : vector<1x256xi32>
    %31 = arith.select %28, %30, %19 : vector<1x256xi1>, vector<1x256xi32>
    %c17_i32 = arith.constant 17 : i32
    %32 = tpu.dynamic_rotate %14 by %c17_i32 dim 1 : vector<8x256xf32>, i32 -> vector<8x256xf32>
    %c16_i32_8 = arith.constant 16 : i32
    %33 = vector.broadcast %c16_i32_8 : i32 to vector<1x256xi32>
    %34 = arith.cmpi sge, %15, %33 : vector<1x256xi32>
    %c1_i32_9 = arith.constant 1 : i32
    %35 = vector.broadcast %c1_i32_9 : i32 to vector<1x256xi32>
    %36 = arith.cmpi sge, %31, %35 : vector<1x256xi32>
    %37 = arith.andi %34, %36 : vector<1x256xi1>
    %cst_10 = arith.constant 0.000000e+00 : f32
    %38 = vector.shape_cast %37 : vector<1x256xi1> to vector<1x256xi1>
    %39 = vector.broadcast %38 : vector<1x256xi1> to vector<8x256xi1>
    %40 = vector.broadcast %cst_10 : f32 to vector<8x256xf32>
    %41 = arith.select %39, %32, %40 : vector<8x256xi1>, vector<8x256xf32>
    %c16_i32_11 = arith.constant 16 : i32
    %42 = tpu.dynamic_rotate %14 by %c16_i32_11 dim 1 : vector<8x256xf32>, i32 -> vector<8x256xf32>
    %c16_i32_12 = arith.constant 16 : i32
    %43 = vector.broadcast %c16_i32_12 : i32 to vector<1x256xi32>
    %44 = arith.cmpi sge, %15, %43 : vector<1x256xi32>
    %cst_13 = arith.constant 0.000000e+00 : f32
    %45 = vector.shape_cast %44 : vector<1x256xi1> to vector<1x256xi1>
    %46 = vector.broadcast %45 : vector<1x256xi1> to vector<8x256xi1>
    %47 = vector.broadcast %cst_13 : f32 to vector<8x256xf32>
    %48 = arith.select %46, %42, %47 : vector<8x256xi1>, vector<8x256xf32>
    %c15_i32 = arith.constant 15 : i32
    %49 = tpu.dynamic_rotate %14 by %c15_i32 dim 1 : vector<8x256xf32>, i32 -> vector<8x256xf32>
    %c16_i32_14 = arith.constant 16 : i32
    %50 = vector.broadcast %c16_i32_14 : i32 to vector<1x256xi32>
    %51 = arith.cmpi sge, %15, %50 : vector<1x256xi32>
    %c15_i32_15 = arith.constant 15 : i32
    %52 = vector.broadcast %c15_i32_15 : i32 to vector<1x256xi32>
    %53 = arith.cmpi slt, %31, %52 : vector<1x256xi32>
    %54 = arith.andi %51, %53 : vector<1x256xi1>
    %cst_16 = arith.constant 0.000000e+00 : f32
    %55 = vector.shape_cast %54 : vector<1x256xi1> to vector<1x256xi1>
    %56 = vector.broadcast %55 : vector<1x256xi1> to vector<8x256xi1>
    %57 = vector.broadcast %cst_16 : f32 to vector<8x256xf32>
    %58 = arith.select %56, %49, %57 : vector<8x256xi1>, vector<8x256xf32>
    %c1_i32_17 = arith.constant 1 : i32
    %59 = tpu.dynamic_rotate %14 by %c1_i32_17 dim 1 : vector<8x256xf32>, i32 -> vector<8x256xf32>
    %c1_i32_18 = arith.constant 1 : i32
    %60 = vector.broadcast %c1_i32_18 : i32 to vector<1x256xi32>
    %61 = arith.cmpi sge, %31, %60 : vector<1x256xi32>
    %cst_19 = arith.constant 0.000000e+00 : f32
    %62 = vector.shape_cast %61 : vector<1x256xi1> to vector<1x256xi1>
    %63 = vector.broadcast %62 : vector<1x256xi1> to vector<8x256xi1>
    %64 = vector.broadcast %cst_19 : f32 to vector<8x256xf32>
    %65 = arith.select %63, %59, %64 : vector<8x256xi1>, vector<8x256xf32>
    %c255_i32 = arith.constant 255 : i32
    %66 = tpu.dynamic_rotate %14 by %c255_i32 dim 1 : vector<8x256xf32>, i32 -> vector<8x256xf32>
    %c15_i32_20 = arith.constant 15 : i32
    %67 = vector.broadcast %c15_i32_20 : i32 to vector<1x256xi32>
    %68 = arith.cmpi slt, %31, %67 : vector<1x256xi32>
    %cst_21 = arith.constant 0.000000e+00 : f32
    %69 = vector.shape_cast %68 : vector<1x256xi1> to vector<1x256xi1>
    %70 = vector.broadcast %69 : vector<1x256xi1> to vector<8x256xi1>
    %71 = vector.broadcast %cst_21 : f32 to vector<8x256xf32>
    %72 = arith.select %70, %66, %71 : vector<8x256xi1>, vector<8x256xf32>
    %c241_i32 = arith.constant 241 : i32
    %73 = tpu.dynamic_rotate %14 by %c241_i32 dim 1 : vector<8x256xf32>, i32 -> vector<8x256xf32>
    %c240_i32 = arith.constant 240 : i32
    %74 = vector.broadcast %c240_i32 : i32 to vector<1x256xi32>
    %75 = arith.cmpi slt, %15, %74 : vector<1x256xi32>
    %c1_i32_22 = arith.constant 1 : i32
    %76 = vector.broadcast %c1_i32_22 : i32 to vector<1x256xi32>
    %77 = arith.cmpi sge, %31, %76 : vector<1x256xi32>
    %78 = arith.andi %75, %77 : vector<1x256xi1>
    %cst_23 = arith.constant 0.000000e+00 : f32
    %79 = vector.shape_cast %78 : vector<1x256xi1> to vector<1x256xi1>
    %80 = vector.broadcast %79 : vector<1x256xi1> to vector<8x256xi1>
    %81 = vector.broadcast %cst_23 : f32 to vector<8x256xf32>
    %82 = arith.select %80, %73, %81 : vector<8x256xi1>, vector<8x256xf32>
    %c240_i32_24 = arith.constant 240 : i32
    %83 = tpu.dynamic_rotate %14 by %c240_i32_24 dim 1 : vector<8x256xf32>, i32 -> vector<8x256xf32>
    %c240_i32_25 = arith.constant 240 : i32
    %84 = vector.broadcast %c240_i32_25 : i32 to vector<1x256xi32>
    %85 = arith.cmpi slt, %15, %84 : vector<1x256xi32>
    %cst_26 = arith.constant 0.000000e+00 : f32
    %86 = vector.shape_cast %85 : vector<1x256xi1> to vector<1x256xi1>
    %87 = vector.broadcast %86 : vector<1x256xi1> to vector<8x256xi1>
    %88 = vector.broadcast %cst_26 : f32 to vector<8x256xf32>
    %89 = arith.select %87, %83, %88 : vector<8x256xi1>, vector<8x256xf32>
    %c239_i32 = arith.constant 239 : i32
    %90 = tpu.dynamic_rotate %14 by %c239_i32 dim 1 : vector<8x256xf32>, i32 -> vector<8x256xf32>
    %c240_i32_27 = arith.constant 240 : i32
    %91 = vector.broadcast %c240_i32_27 : i32 to vector<1x256xi32>
    %92 = arith.cmpi slt, %15, %91 : vector<1x256xi32>
    %c15_i32_28 = arith.constant 15 : i32
    %93 = vector.broadcast %c15_i32_28 : i32 to vector<1x256xi32>
    %94 = arith.cmpi slt, %31, %93 : vector<1x256xi32>
    %95 = arith.andi %92, %94 : vector<1x256xi1>
    %cst_29 = arith.constant 0.000000e+00 : f32
    %96 = vector.shape_cast %95 : vector<1x256xi1> to vector<1x256xi1>
    %97 = vector.broadcast %96 : vector<1x256xi1> to vector<8x256xi1>
    %98 = vector.broadcast %cst_29 : f32 to vector<8x256xf32>
    %99 = arith.select %97, %90, %98 : vector<8x256xi1>, vector<8x256xf32>
    %100 = tpu.concatenate %41, %48, %58, %65, %14, %72, %82, %89, %99 in 0 : vector<8x256xf32>, vector<8x256xf32>, vector<8x256xf32>, vector<8x256xf32>, vector<8x256xf32>, vector<8x256xf32>, vector<8x256xf32>, vector<8x256xf32>, vector<8x256xf32> -> vector<72x256xf32>
    %101 = arith.truncf %100 : vector<72x256xf32> to vector<72x256xbf16>
    %c0_30 = arith.constant 0 : index
    %c0_31 = arith.constant 0 : index
    %102 = vector.load %arg3[%c0_30, %c0_31] : memref<8x72xbf16, #tpu.memory_space<vmem>>, vector<8x72xbf16>
    %cst_32 = arith.constant dense<0.000000e+00> : vector<8x256xf32>
    %103 = tpu.matmul %102, %101, %cst_32 {dimension_numbers = #tpu.dot_dimension_numbers<[1], [0], [0], [1], [0, 0, 1, 1], [], []>} : vector<8x72xbf16>, vector<72x256xbf16>, vector<8x256xf32> -> vector<8x256xf32>
    %104 = vector.broadcast %3 : vector<8x1xf32> to vector<8x256xf32>
    %105 = arith.addf %103, %104 : vector<8x256xf32>
    %106 = arith.truncf %105 : vector<8x256xf32> to vector<8x256xbf16>
    %c0_33 = arith.constant 0 : index
    %c0_34 = arith.constant 0 : index
    %c0_35 = arith.constant 0 : index
    %107 = vector.load %arg4[%c0_33, %c0_34, %c0_35] : memref<1x8x256xbf16, #tpu.memory_space<vmem>>, vector<1x8x256xbf16>
    %108 = vector.shape_cast %107 : vector<1x8x256xbf16> to vector<8x256xbf16>
    %109 = vector.shape_cast %106 : vector<8x256xbf16> to vector<1x8x256xbf16>
    tpu.vector_store %arg4[%c0_33, %c0_34, %c0_35], %109 {strides = array<i32>} : memref<1x8x256xbf16, #tpu.memory_space<vmem>>, vector<1x8x256xbf16>,
    %110 = vector.extract_strided_slice %105 {offsets = [0, 0], sizes = [8, 128], strides = [1, 1]} : vector<8x256xf32> to vector<8x128xf32>
    %111 = arith.mulf %110, %110 : vector<8x128xf32>
    %112 = vector.extract_strided_slice %105 {offsets = [0, 128], sizes = [8, 128], strides = [1, 1]} : vector<8x256xf32> to vector<8x128xf32>
    %113 = arith.addf %110, %112 : vector<8x128xf32>
    %114 = arith.mulf %112, %112 : vector<8x128xf32>
    %115 = arith.addf %111, %114 : vector<8x128xf32>
    %116 = tpu.concatenate %113, %115 in 0 : vector<8x128xf32>, vector<8x128xf32> -> vector<16x128xf32>
    %c0_36 = arith.constant 0 : index
    %c0_37 = arith.constant 0 : index
    %c0_38 = arith.constant 0 : index
    %117 = vector.load %arg5[%c0_36, %c0_37, %c0_38] : memref<1x16x128xf32, #tpu.memory_space<vmem>>, vector<1x16x128xf32>
    %118 = vector.shape_cast %117 : vector<1x16x128xf32> to vector<16x128xf32>
    %119 = vector.shape_cast %116 : vector<16x128xf32> to vector<1x16x128xf32>
    tpu.vector_store %arg5[%c0_36, %c0_37, %c0_38], %119 {strides = array<i32>} : memref<1x16x128xf32, #tpu.memory_space<vmem>>, vector<1x16x128xf32>,
    return
  }
  func.func @transform_0(%arg0: i32) -> (i32, i32, i32) {
    %c0_i32 = arith.constant 0 : i32
    %c0_i32_0 = arith.constant 0 : i32
    %c0_i32_1 = arith.constant 0 : i32
    return %arg0, %c0_i32, %c0_i32_0 : i32, i32, i32
  }
  func.func @transform_1(%arg0: i32) -> (i32, i32) {
    %c0_i32 = arith.constant 0 : i32
    %c0_i32_0 = arith.constant 0 : i32
    %c0_i32_1 = arith.constant 0 : i32
    return %c0_i32, %c0_i32_0 : i32, i32
  }
  func.func @transform_2(%arg0: i32) -> (i32, i32) {
    %c0_i32 = arith.constant 0 : i32
    %c0_i32_0 = arith.constant 0 : i32
    %c0_i32_1 = arith.constant 0 : i32
    return %c0_i32, %c0_i32_0 : i32, i32
  }
  func.func @transform_3(%arg0: i32) -> (i32, i32, i32) {
    %c0_i32 = arith.constant 0 : i32
    %c0_i32_0 = arith.constant 0 : i32
    %c0_i32_1 = arith.constant 0 : i32
    return %arg0, %c0_i32, %c0_i32_0 : i32, i32, i32
  }
  func.func @transform_4(%arg0: i32) -> (i32, i32, i32) {
    %c0_i32 = arith.constant 0 : i32
    %c0_i32_0 = arith.constant 0 : i32
    %c0_i32_1 = arith.constant 0 : i32
    return %arg0, %c0_i32, %c0_i32_0 : i32, i32, i32
  }
}

</mosaic_0001>

<llo_original>
// kernel: tpu_custom_call.1
$region0: #{tpu_custom_call.1}
  #allocation0 [shape = 'u32[]', space=smem, size = 0x4, offset = 0x4, fixed_abs, tag = 'smem constant byte address 0x4 - core index']
  #allocation1 [shape = 'u32[72,128]{1,0:T(1,128)}', space=vmem, size = 0x9000, scoped, tag = 'internal scratch']
  %s0 = inlined_call_operand.hbm [shape: f32[8,256], index: 0, kind: input, shape index: {}]
  %s1 = inlined_call_operand.hbm [shape: f32[8,256], index: 1, kind: output, shape index: {}]
  %s2 = sld [smem:[#allocation0]]
  $region18: #{tpu_custom_call.1} parent=0
    _
  %s4 = ssub.s32 1, %s2
  %s5 = scalar_select 0, %s4, %s2
  $region1: #{tpu_custom_call.1} parent=0
    #allocation2 [shape = 'u8[8192]{0}', space=vmem, size = 0x2000, scoped, tag = 'input window, operand 0, single buffered']
    #allocation3 [shape = 's32[1]{0}', space=sflag, size = 0x4, scoped, tag = 'scoped memory for tpu_custom_call.1']
    #allocation4 [shape = 's32[1]{0}', space=sflag, size = 0x4, scoped, tag = 'scoped memory for tpu_custom_call.1']
    #allocation5 [shape = 'u8[8192]{0}', space=vmem, size = 0x2000, scoped, tag = 'output window, operand 0, single buffered']
    %6 = vsyncpa [#allocation3], 0
    %7 = vsyncpa [#allocation4], 0
    // Predicated region
    $region2: #{tpu_custom_call.1} parent=1 // pred_check
      _
    $region3: #{tpu_custom_call.1} parent=1 // pred_check_branch
      %9 = sbr.rel (0) target = $region5
    $region4: #{tpu_custom_call.1} parent=1 // pred_region
      %11 = vsyncadd [#allocation3], 0
      %s13 = sshll.u32 %s0, 4
      %s14 = int_to_ptr.hbm [resolvable:$true] %s13
      %s15 = sshll.u32 [#allocation2], 4
      %s16 = int_to_ptr.vmem [resolvable:$true] %s15
      %18 = dma.hbm_to_vmem [thread:$0]  %s14, 256, %s16, [#allocation3]
    $region5: #{tpu_custom_call.1} parent=1 // pred_fallthru
      _
    // Predicated region
    $region6: #{tpu_custom_call.1} parent=1 // pred_check
      _
    $region7: #{tpu_custom_call.1} parent=1 // pred_check_branch
      %20 = sbr.rel (0) target = $region9
    $region8: #{tpu_custom_call.1} parent=1 // pred_region
      %22 = dma.done [#allocation3], 256
    $region9: #{tpu_custom_call.1} parent=1 // pred_fallthru
      _
    %v23 = vld [vmem:[#allocation2] sm:$0xff]
    %v24 = vld [vmem:[#allocation2 + $0x8] sm:$0xff]
    %25 = vrot.lane.b32.xlu0 %v23, 1
    %v26 = vpop.permute.xlu0 %25
    %27 = vrot.lane.b32.xlu0 %v24, 1
    %v28 = vpop.permute.xlu0 %27
    %v29 = vlaneseq
    %v30 = vand.u32 %v29, 127
    %vm31 = vcmp.lt.s32.totalorder %v30, 1
    %v32 = vsel %vm31, %v26, %v28
    %v33 = vsel %vm31, %v28, %v26
    %34 = vst [vmem:[#allocation5] sm:$0xff] %v33
    %35 = vst [vmem:[#allocation5 + $0x8] sm:$0xff] %v32
    // Predicated region
    $region10: #{tpu_custom_call.1} parent=1 // pred_check
      _
    $region11: #{tpu_custom_call.1} parent=1 // pred_check_branch
      %37 = sbr.rel (0) target = $region13
    $region12: #{tpu_custom_call.1} parent=1 // pred_region
      %39 = vsyncadd [#allocation4], 0
      %s41 = sshll.u32 [#allocation5], 4
      %s42 = int_to_ptr.vmem [resolvable:$true] %s41
      %s43 = sshll.u32 %s1, 4
      %s44 = int_to_ptr.hbm [resolvable:$true] %s43
      %46 = dma.vmem_to_hbm [thread:$0]  %s42, 256, %s44, [#allocation4]
    $region13: #{tpu_custom_call.1} parent=1 // pred_fallthru
      _
    // Predicated region
    $region14: #{tpu_custom_call.1} parent=1 // pred_check
      _
    $region15: #{tpu_custom_call.1} parent=1 // pred_check_branch
      %48 = sbr.rel (0) target = $region17
    $region16: #{tpu_custom_call.1} parent=1 // pred_region
      %50 = dma.done [#allocation4], 256
    $region17: #{tpu_custom_call.1} parent=1 // pred_fallthru
      _
    %51 = vsyncpa [#allocation3], 1
    %52 = vsyncpa [#allocation4], 1

// kernel: _lambda_.3
$region0: #{_lambda_.3}
  #allocation0 [shape = 'u32[]', space=smem, size = 0x4, offset = 0x4, fixed_abs, tag = 'smem constant byte address 0x4 - core index']
  #allocation1 [shape = 'u32[72,128]{1,0:T(1,128)}', space=vmem, size = 0x9000, scoped, tag = 'internal scratch']
  %s0 = inlined_call_operand.vmem [shape: f32[2,8,256], index: 0, kind: input, shape index: {}]
  %s1 = inlined_call_operand.vmem [shape: bf16[2,8,256], index: 1, kind: input, shape index: {}]
  %s2 = inlined_call_operand.vmem [shape: f32[48,1], index: 2, kind: input, shape index: {}]
  %s3 = inlined_call_operand.vmem [shape: bf16[16,64], index: 3, kind: input, shape index: {}]
  %s4 = inlined_call_operand.vmem [shape: f32[2,16,256], index: 4, kind: output, shape index: {}]
  %s5 = sld [smem:[#allocation0]]
  $region49: #{_lambda_.3} parent=0
    _
  %s7 = ssub.s32 1, %s5
  %s8 = scalar_select 0, %s7, %s5
  loop: start=0, step=1, limit=4
  $region2: #{_lambda_.3} parent=0 // loop_pre_header
    _
  $region3: #{_lambda_.3} parent=0 // loop_header
    %s10 = sphi 0, %s14
    %p11 = scmp.ge.s32.totalorder %s10, 4
    %s20 = sphi 0, %s22
    %s23 = sphi 0, %s20
    %s24 = sphi 0, %s23
    %s40 = sphi 0, %s24
    %s46 = sphi 0, %s48
    %s49 = sphi 0, %s46
    %s50 = sphi 0, %s49
    %s66 = sphi 0, %s50
    %s70 = sphi 0, %s70
    %s72 = sphi 0, %s70
    %s73 = sphi 0, %s72
    %s87 = sphi 0, %s73
    %s91 = sphi 0, %s91
    %s93 = sphi 0, %s91
    %s94 = sphi 0, %s93
    %s108 = sphi 0, %s94
    %s114 = sphi 0, %s116
    %s117 = sphi 0, %s114
    %s118 = sphi 0, %s117
    %s134 = sphi 0, %s118
  $region4: #{_lambda_.3} parent=0 // loop_header_branch
    %13 = sbr.rel (%p11) target = $region8
  $region5: #{_lambda_.3} parent=0 // loop_body
    %s15 = ssub.s32 %s10, 1
    %s16 = ssub.s32 %s10, 2
    %s17 = sadd.s32 %s10, 1
    %s18 = ssub.s32 %s10, %s17
    %p19 = scmp.eq.s32.totalorder %s18, 0
    %s21 = sadd.s32 %s20, 1
    %s22 = scalar_select %p19, %s20, %s21
    %p25 = pneg %p19
    %p26 = scmp.eq.s32.totalorder %s10, 1
    %p27 = por %p25, %p26
    %p28 = scmp.ne.s32.totalorder %s20, %s23
    %p29 = scmp.eq.s32.totalorder %s10, 0
    %p30 = por %p28, %p29
    %p31 = scmp.ne.s32.totalorder %s20, %s23
    %p32 = scmp.eq.s32.totalorder %s15, 1
    %p33 = por %p31, %p32
    %p34 = scmp.ne.s32.totalorder %s23, %s24
    %p35 = scmp.eq.s32.totalorder %s15, 0
    %p36 = por %p34, %p35
    %p37 = scmp.ne.s32.totalorder %s23, %s24
    %p38 = scmp.eq.s32.totalorder %s16, 1
    %p39 = por %p37, %p38
    %p41 = scmp.ne.s32.totalorder %s24, %s40
    %p42 = scmp.eq.s32.totalorder %s16, 0
    %p43 = por %p41, %p42
    %s44 = ssub.s32 %s10, %s17
    %p45 = scmp.eq.s32.totalorder %s44, 0
    %s47 = sadd.s32 %s46, 1
    %s48 = scalar_select %p45, %s46, %s47
    %p51 = pneg %p45
    %p52 = scmp.eq.s32.totalorder %s10, 1
    %p53 = por %p51, %p52
    %p54 = scmp.ne.s32.totalorder %s46, %s49
    %p55 = scmp.eq.s32.totalorder %s10, 0
    %p56 = por %p54, %p55
    %p57 = scmp.ne.s32.totalorder %s46, %s49
    %p58 = scmp.eq.s32.totalorder %s15, 1
    %p59 = por %p57, %p58
    %p60 = scmp.ne.s32.totalorder %s49, %s50
    %p61 = scmp.eq.s32.totalorder %s15, 0
    %p62 = por %p60, %p61
    %p63 = scmp.ne.s32.totalorder %s49, %s50
    %p64 = scmp.eq.s32.totalorder %s16, 1
    %p65 = por %p63, %p64
    %p67 = scmp.ne.s32.totalorder %s50, %s66
    %p68 = scmp.eq.s32.totalorder %s16, 0
    %p69 = por %p67, %p68
    %s71 = sadd.s32 %s70, 1
    %p74 = scmp.eq.s32.totalorder %s10, 1
    %p75 = scmp.ne.s32.totalorder %s70, %s72
    %p76 = scmp.eq.s32.totalorder %s10, 0
    %p77 = por %p75, %p76
    %p78 = scmp.ne.s32.totalorder %s70, %s72
    %p79 = scmp.eq.s32.totalorder %s15, 1
    %p80 = por %p78, %p79
    %p81 = scmp.ne.s32.totalorder %s72, %s73
    %p82 = scmp.eq.s32.totalorder %s15, 0
    %p83 = por %p81, %p82
    %p84 = scmp.ne.s32.totalorder %s72, %s73
    %p85 = scmp.eq.s32.totalorder %s16, 1
    %p86 = por %p84, %p85
    %p88 = scmp.ne.s32.totalorder %s73, %s87
    %p89 = scmp.eq.s32.totalorder %s16, 0
    %p90 = por %p88, %p89
    %s92 = sadd.s32 %s91, 1
    %p95 = scmp.eq.s32.totalorder %s10, 1
    %p96 = scmp.ne.s32.totalorder %s91, %s93
    %p97 = scmp.eq.s32.totalorder %s10, 0
    %p98 = por %p96, %p97
    %p99 = scmp.ne.s32.totalorder %s91, %s93
    %p100 = scmp.eq.s32.totalorder %s15, 1
    %p101 = por %p99, %p100
    %p102 = scmp.ne.s32.totalorder %s93, %s94
    %p103 = scmp.eq.s32.totalorder %s15, 0
    %p104 = por %p102, %p103
    %p105 = scmp.ne.s32.totalorder %s93, %s94
    %p106 = scmp.eq.s32.totalorder %s16, 1
    %p107 = por %p105, %p106
    %p109 = scmp.ne.s32.totalorder %s94, %s108
    %p110 = scmp.eq.s32.totalorder %s16, 0
    %p111 = por %p109, %p110
    %s112 = ssub.s32 %s10, %s17
    %p113 = scmp.eq.s32.totalorder %s112, 0
    %s115 = sadd.s32 %s114, 1
    %s116 = scalar_select %p113, %s114, %s115
    %p119 = pneg %p113
    %p120 = scmp.eq.s32.totalorder %s10, 1
    %p121 = por %p119, %p120
    %p122 = scmp.ne.s32.totalorder %s114, %s117
    %p123 = scmp.eq.s32.totalorder %s10, 0
    %p124 = por %p122, %p123
    %p125 = scmp.ne.s32.totalorder %s114, %s117
    %p126 = scmp.eq.s32.totalorder %s15, 1
    %p127 = por %p125, %p126
    %p128 = scmp.ne.s32.totalorder %s117, %s118
    %p129 = scmp.eq.s32.totalorder %s15, 0
    %p130 = por %p128, %p129
    %p131 = scmp.ne.s32.totalorder %s117, %s118
    %p132 = scmp.eq.s32.totalorder %s16, 1
    %p133 = por %p131, %p132
    %p135 = scmp.ne.s32.totalorder %s118, %s134
    %p136 = scmp.eq.s32.totalorder %s16, 0
    %p137 = por %p135, %p136
    %p138 = scmp.le.s32.totalorder 1, %s10
    %p139 = scmp.lt.s32.totalorder %s10, 3
    %p140 = pnand %p138, %p139
    %p141 = pneg %p140
    // Predicated region
    $region9: #{_lambda_.3} parent=5 // pred_check
      _
    $region10: #{_lambda_.3} parent=5 // pred_check_branch
      %143 = sbr.rel (%p140) target = $region12
    $region11: #{_lambda_.3} parent=5 // pred_region
      %s144 = ssub.s32 %s10, 1
      // Predicated region
      $region13: #{_lambda_.3} parent=11 // pred_check
        %p145 = pneg %p83
      $region14: #{_lambda_.3} parent=11 // pred_check_branch
        %147 = sbr.rel (%p145) target = $region16
      $region15: #{_lambda_.3} parent=11 // pred_region
        _
      $region16: #{_lambda_.3} parent=11 // pred_fallthru
        _
      // Predicated region
      $region17: #{_lambda_.3} parent=11 // pred_check
        %p148 = pneg %p104
      $region18: #{_lambda_.3} parent=11 // pred_check_branch
        %150 = sbr.rel (%p148) target = $region20
      $region19: #{_lambda_.3} parent=11 // pred_region
        _
      $region20: #{_lambda_.3} parent=11 // pred_fallthru
        _
    $region12: #{_lambda_.3} parent=5 // pred_fallthru
      _
    %p151 = scmp.lt.s32.totalorder %s10, 2
    // Predicated region
    $region21: #{_lambda_.3} parent=5 // pred_check
      %p152 = pneg %p151
    $region22: #{_lambda_.3} parent=5 // pred_check_branch
      %154 = sbr.rel (%p152) target = $region24
    $region23: #{_lambda_.3} parent=5 // pred_region
      // Predicated region
      $region25: #{_lambda_.3} parent=23 // pred_check
        %p155 = pneg %p30
      $region26: #{_lambda_.3} parent=23 // pred_check_branch
        %157 = sbr.rel (%p155) target = $region28
      $region27: #{_lambda_.3} parent=23 // pred_region
        %p158 = scmp.lt.s32.totalorder %s10, 1
        %s159 = scalar_select %p158, %s10, 1
        %s160 = smul.addr %s159, 2
        %s161 = smul.addr %s160, 8
        %s162 = scalar_lea.vmem %s0, %s161
      $region28: #{_lambda_.3} parent=23 // pred_fallthru
        _
      // Predicated region
      $region29: #{_lambda_.3} parent=23 // pred_check
        %p163 = pneg %p56
      $region30: #{_lambda_.3} parent=23 // pred_check_branch
        %165 = sbr.rel (%p163) target = $region32
      $region31: #{_lambda_.3} parent=23 // pred_region
        %p166 = scmp.lt.s32.totalorder %s10, 1
        %s167 = scalar_select %p166, %s10, 1
        %s168 = smul.addr %s167, 2
        %s169 = smul.addr %s168, 4
        %s170 = scalar_lea.vmem %s1, %s169
      $region32: #{_lambda_.3} parent=23 // pred_fallthru
        _
    $region24: #{_lambda_.3} parent=5 // pred_fallthru
      _
    %p171 = scmp.le.s32.totalorder 1, %s10
    %p172 = scmp.lt.s32.totalorder %s10, 3
    %p173 = pnand %p171, %p172
    %p174 = pneg %p173
    // Predicated region
    $region33: #{_lambda_.3} parent=5 // pred_check
      _
    $region34: #{_lambda_.3} parent=5 // pred_check_branch
      %176 = sbr.rel (%p173) target = $region36
    $region35: #{_lambda_.3} parent=5 // pred_region
      %s177 = ssub.s32 %s10, 1
      %p178 = scmp.lt.s32.totalorder %s15, 1
      %s179 = scalar_select %p178, %s15, 1
      %s180 = smul.addr %s179, 2
      %s181 = smul.addr %s180, 8
      %s182 = scalar_lea.vmem %s0, %s181
      %p183 = pneg %p36
      %p184 = pneg %p33
      %p185 = scmp.lt.s32.totalorder %s15, 1
      %s186 = scalar_select %p185, %s15, 1
      %s187 = smul.addr %s186, 2
      %s188 = smul.addr %s187, 4
      %s189 = scalar_lea.vmem %s1, %s188
      %p190 = pneg %p62
      %p191 = pneg %p59
      %p192 = pneg %p83
      %p193 = pneg %p80
      %p194 = pneg %p104
      %p195 = pneg %p101
      %p196 = pneg %p130
      %p197 = pneg %p127
      %p198 = scmp.lt.s32.totalorder %s15, 1
      %s199 = scalar_select %p198, %s15, 1
      %s200 = smul.addr %s199, 4
      %s201 = smul.addr %s200, 8
      %s202 = scalar_lea.vmem %s4, %s201
      %p203 = scmp.lt.s32.totalorder %s15, 1
      %s204 = scalar_select %p203, %s15, 1
      %s205 = smul.addr %s204, 2
      %s206 = smul.addr %s205, 8
      %s207 = scalar_lea.vmem %s0, %s206
      %p208 = scmp.lt.s32.totalorder %s15, 1
      %s209 = scalar_select %p208, %s15, 1
      %s210 = smul.addr %s209, 2
      %s211 = smul.addr %s210, 4
      %s212 = scalar_lea.vmem %s1, %s211
      %p213 = scmp.lt.s32.totalorder %s15, 1
      %s214 = scalar_select %p213, %s15, 1
      %s215 = smul.addr %s214, 4
      %s216 = smul.addr %s215, 8
      %s217 = scalar_lea.vmem %s4, %s216
      %v219 = vld [vmem:[%s2] sm:$0xff]
      %v220 = vld [vmem:[%s2 + $0x8] sm:$0xff]
      %v221 = vld [vmem:[%s2 + $0x10] sm:$0xff]
      %v222 = vld [vmem:[%s2 + $0x18] sm:$0xff]
      %v223 = vld [vmem:[%s2 + $0x20] sm:$0xff]
      %v224 = vld [vmem:[%s2 + $0x28] sm:$0xff]
      %v225 = vld [vmem:[%s207] sm:$0xff]
      %v226 = vld [vmem:[%s207 + $0x8] sm:$0xff]
      %v227 = vld [vmem:[%s212] sm:$0xff]
      %v228 = vunpack.c.l.bf16 %v227
      %v229 = vunpack.c.h.bf16 %v227
      %231 = vset.pattern.permute.xlu0 0
      %232 = vperm.xlu0 %231, %v219
      %v233 = vpop.permute.xlu0 %232
      %236 = vset.pattern.permute.xlu0 0
      %237 = vperm.xlu0 %236, %v220
      %v238 = vpop.permute.xlu0 %237
      %v240 = vmul.f32 %v225, %v233
      %v241 = vmul.f32 %v226, %v233
      %v242 = vmul.f32 %v228, %v238
      %v243 = vmul.f32 %v229, %v238
      %245 = vset.pattern.permute.xlu0 0
      %246 = vperm.xlu0 %245, %v221
      %v247 = vpop.permute.xlu0 %246
      %250 = vset.pattern.permute.xlu0 0
      %251 = vperm.xlu0 %250, %v222
      %v252 = vpop.permute.xlu0 %251
      %v254 = vadd.f32 %v240, %v247
      %v255 = vadd.f32 %v241, %v247
      %v256 = vadd.f32 %v242, %v252
      %v257 = vadd.f32 %v243, %v252
      %vm258 = vcmp.ge.f32.partialorder %v254, 0.0
      %vm259 = vcmp.ge.f32.partialorder %v255, 0.0
      %vm260 = vcmp.ge.f32.partialorder %v256, 0.0
      %vm261 = vcmp.ge.f32.partialorder %v257, 0.0
      %v262 = vmul.f32 %v254, 0.01
      %v263 = vmul.f32 %v255, 0.01
      %v264 = vmul.f32 %v256, 0.01
      %v265 = vmul.f32 %v257, 0.01
      %v266 = vsel %vm258, %v254, %v262
      %v267 = vsel %vm259, %v255, %v263
      %v268 = vsel %vm260, %v256, %v264
      %v269 = vsel %vm261, %v257, %v265
      %v270 = vlaneseq
      %v271 = vand.u32 %v270, 127
      %v272 = vadd.s32 %v271, 128
      %vm273 = vcmp.lt.s32.totalorder %v271, 0
      %v274 = vsub.s32 0, %v271
      %v275 = vsel %vm273, %v274, %v271
      %v276 = vshrl.u32 %v275, 4
      %v277 = vand.u32 %v275, 15
      %v278 = vsub.s32 0, %v277
      %v279 = vsel %vm273, %v278, %v277
      %vm280 = vcmp.lt.s32.totalorder %v272, 0
      %v281 = vsub.s32 0, %v272
      %v282 = vsel %vm280, %v281, %v272
      %v283 = vshrl.u32 %v282, 4
      %v284 = vand.u32 %v282, 15
      %v285 = vsub.s32 0, %v284
      %v286 = vsel %vm280, %v285, %v284
      %vm287 = vcmp.ne.s32.totalorder %v279, 0
      %vm288 = vcmp.ne.s32.totalorder %v286, 0
      %vm289 = vcmp.lt.s32.totalorder %v279, 0
      %vm290 = vcmp.lt.s32.totalorder %v286, 0
      %vm291 = vmand %vm289, %vm287
      %vm292 = vmand %vm290, %vm288
      %v293 = vadd.s32 %v279, 16
      %v294 = vadd.s32 %v286, 16
      %v295 = vsel %vm291, %v293, %v279
      %v296 = vsel %vm292, %v294, %v286
      %297 = vrot.lane.b32.xlu0 %v266, 127
      %v298 = vpop.permute.xlu0 %297
      %299 = vrot.lane.b32.xlu0 %v268, 127
      %v300 = vpop.permute.xlu0 %299
      %301 = vrot.lane.b32.xlu0 %v267, 127
      %v302 = vpop.permute.xlu0 %301
      %303 = vrot.lane.b32.xlu0 %v269, 127
      %v304 = vpop.permute.xlu0 %303
      %vm305 = vcmp.lt.s32.totalorder %v271, 127
      %v306 = vsel %vm305, %v298, %v302
      %v307 = vsel %vm305, %v300, %v304
      %v308 = vsel %vm305, %v302, %v298
      %v309 = vsel %vm305, %v304, %v300
      %vm310 = vcmp.lt.s32.totalorder %v295, 15
      %vm311 = vcmp.lt.s32.totalorder %v296, 15
      %v312 = vsel %vm310, 1, 0
      %v313 = vsel %vm311, 1, 0
      %vm314 = vcmp.eq.s32.totalorder %v312, 1
      %vm315 = vcmp.eq.s32.totalorder %v313, 1
      %v316 = vsel %vm314, %v306, 0.0
      %v317 = vsel %vm315, %v308, 0.0
      %v318 = vsel %vm314, %v307, 0.0
      %v319 = vsel %vm315, %v309, 0.0
      %320 = vrot.lane.b32.xlu0 %v266, 112
      %v321 = vpop.permute.xlu0 %320
      %322 = vrot.lane.b32.xlu0 %v268, 112
      %v323 = vpop.permute.xlu0 %322
      %324 = vrot.lane.b32.xlu0 %v267, 112
      %v325 = vpop.permute.xlu0 %324
      %326 = vrot.lane.b32.xlu0 %v269, 112
      %v327 = vpop.permute.xlu0 %326
      %vm328 = vcmp.lt.s32.totalorder %v271, 112
      %v329 = vsel %vm328, %v321, %v325
      %v330 = vsel %vm328, %v323, %v327
      %v331 = vsel %vm328, %v325, %v321
      %v332 = vsel %vm328, %v327, %v323
      %vm333 = vcmp.lt.s32.totalorder %v271, 240
      %vm334 = vcmp.lt.s32.totalorder %v272, 240
      %v335 = vsel %vm333, 1, 0
      %v336 = vsel %vm334, 1, 0
      %vm337 = vcmp.eq.s32.totalorder %v335, 1
      %vm338 = vcmp.eq.s32.totalorder %v336, 1
      %v339 = vsel %vm337, %v329, 0.0
      %v340 = vsel %vm338, %v331, 0.0
      %v341 = vsel %vm337, %v330, 0.0
      %v342 = vsel %vm338, %v332, 0.0
      %343 = vrot.lane.b32.xlu0 %v266, 111
      %v344 = vpop.permute.xlu0 %343
      %345 = vrot.lane.b32.xlu0 %v268, 111
      %v346 = vpop.permute.xlu0 %345
      %347 = vrot.lane.b32.xlu0 %v267, 111
      %v348 = vpop.permute.xlu0 %347
      %349 = vrot.lane.b32.xlu0 %v269, 111
      %v350 = vpop.permute.xlu0 %349
      %vm351 = vcmp.lt.s32.totalorder %v271, 111
      %v352 = vsel %vm351, %v344, %v348
      %v353 = vsel %vm351, %v346, %v350
      %v354 = vsel %vm351, %v348, %v344
      %v355 = vsel %vm351, %v350, %v346
      %vm356 = vmand %vm333, %vm310
      %vm357 = vmand %vm334, %vm311
      %v358 = vsel %vm356, 1, 0
      %v359 = vsel %vm357, 1, 0
      %vm360 = vcmp.eq.s32.totalorder %v358, 1
      %vm361 = vcmp.eq.s32.totalorder %v359, 1
      %v362 = vsel %vm360, %v352, 0.0
      %v363 = vsel %vm361, %v354, 0.0
      %v364 = vsel %vm360, %v353, 0.0
      %v365 = vsel %vm361, %v355, 0.0
      %v366 = vpack.c.bf16 %v268, %v266
      %v367 = vpack.c.bf16 %v269, %v267
      %v368 = vpack.c.bf16 %v318, %v316
      %v369 = vpack.c.bf16 %v319, %v317
      %v370 = vpack.c.bf16 %v341, %v339
      %v371 = vpack.c.bf16 %v342, %v340
      %v372 = vpack.c.bf16 %v364, %v362
      %v373 = vpack.c.bf16 %v365, %v363
      %v374 = vld [vmem:[%s3] sm:$0xf]
      %v375 = vld [vmem:[%s3 + $0x4] sm:$0xf]
      %377 = vset.pattern.permute.xlu0 0
      %378 = vperm.xlu0 %377, %v223
      %v379 = vpop.permute.xlu0 %378
      %382 = vset.pattern.permute.xlu0 0
      %383 = vperm.xlu0 %382, %v224
      %v384 = vpop.permute.xlu0 %383
      %v388 = vunpack.c.l.b16 %v374
      %v389 = vunpack.c.l.b16 %v375
      %v390 = vpack.c.b16 %v389, %v388
      %vm391 = vcmask 523264
      %v393 = vsel %vm391, %v390, 0
      %395 = vmatpush.bf16.msra.mxu0 0
      %396 = vmatpush.bf16.msra.mxu0 0
      %397 = vmatpush.bf16.msra.mxu0 0
      %398 = vmatpush.bf16.msra.mxu0 0
      %399 = vmatpush.bf16.msra.mxu0 %v372
      %400 = vmatpush.bf16.msra.mxu0 %v370
      %401 = vmatpush.bf16.msra.mxu0 %v368
      %402 = vmatpush.bf16.msra.mxu0 %v366
      %403 = vmatmul.bf16.gmra.mxu0 %v393
      %v404 = vpop.f32.mrf.mxu0
      %v405 = vadd.f32 %v379, %v404
      %v406 = vpop.f32.mrf.mxu0
      %v407 = vadd.f32 %v384, %v406
      %408 = vdwg.mxu0
      %409 = vmatpush.bf16.msra.mxu0 0
      %410 = vmatpush.bf16.msra.mxu0 0
      %411 = vmatpush.bf16.msra.mxu0 0
      %412 = vmatpush.bf16.msra.mxu0 0
      %413 = vmatpush.bf16.msra.mxu0 %v373
      %414 = vmatpush.bf16.msra.mxu0 %v371
      %415 = vmatpush.bf16.msra.mxu0 %v369
      %416 = vmatpush.bf16.msra.mxu0 %v367
      %417 = vmatmul.bf16.gmra.mxu0 %v393
      %v418 = vpop.f32.mrf.mxu0
      %v419 = vadd.f32 %v379, %v418
      %v420 = vpop.f32.mrf.mxu0
      %v421 = vadd.f32 %v384, %v420
      %422 = vdwg.mxu0
      %423 = vst [vmem:[%s217] sm:$0xff] %v405
      %424 = vst [vmem:[%s217 + $0x8] sm:$0xff] %v419
      %425 = vst [vmem:[%s217 + $0x10] sm:$0xff] %v407
      %426 = vst [vmem:[%s217 + $0x18] sm:$0xff] %v421
      %p427 = scmp.lt.s32.totalorder %s15, 1
      %s428 = scalar_select %p427, %s15, 1
      %s429 = smul.addr %s428, 4
      %s430 = smul.addr %s429, 8
      %s431 = scalar_lea.vmem %s4, %s430
      // Predicated region
      $region37: #{_lambda_.3} parent=35 // pred_check
        %p432 = pneg %p127
      $region38: #{_lambda_.3} parent=35 // pred_check_branch
        %434 = sbr.rel (%p432) target = $region40
      $region39: #{_lambda_.3} parent=35 // pred_region
        _
      $region40: #{_lambda_.3} parent=35 // pred_fallthru
        _
    $region36: #{_lambda_.3} parent=5 // pred_fallthru
      _
    %p435 = scmp.le.s32.totalorder 2, %s10
    // Predicated region
    $region41: #{_lambda_.3} parent=5 // pred_check
      %p436 = pneg %p435
    $region42: #{_lambda_.3} parent=5 // pred_check_branch
      %438 = sbr.rel (%p436) target = $region44
    $region43: #{_lambda_.3} parent=5 // pred_region
      %s439 = ssub.s32 %s10, 2
      // Predicated region
      $region45: #{_lambda_.3} parent=43 // pred_check
        %p440 = pneg %p133
      $region46: #{_lambda_.3} parent=43 // pred_check_branch
        %442 = sbr.rel (%p440) target = $region48
      $region47: #{_lambda_.3} parent=43 // pred_region
        %p443 = scmp.lt.s32.totalorder %s16, 1
        %s444 = scalar_select %p443, %s16, 1
        %s445 = smul.addr %s444, 4
        %s446 = smul.addr %s445, 8
        %s447 = scalar_lea.vmem %s4, %s446
      $region48: #{_lambda_.3} parent=43 // pred_fallthru
        _
    $region44: #{_lambda_.3} parent=5 // pred_fallthru
      _
  $region6: #{_lambda_.3} parent=0 // loop_footer
    %s14 = sadd.s32 1, %s10
  $region7: #{_lambda_.3} parent=0 // loop_footer_branch
    %9 = sbr.rel target = $region3
  $region8: #{_lambda_.3} parent=0 // loop_exit
    _

// kernel: _lambda_.2
$region0: #{_lambda_.2}
  #allocation0 [shape = 'u32[]', space=smem, size = 0x4, offset = 0x4, fixed_abs, tag = 'smem constant byte address 0x4 - core index']
  #allocation1 [shape = 'u32[72,128]{1,0:T(1,128)}', space=vmem, size = 0x9000, scoped, tag = 'internal scratch']
  %s0 = inlined_call_operand.vmem [shape: f32[2,8,256], index: 0, kind: input, shape index: {}]
  %s1 = inlined_call_operand.vmem [shape: f32[24,1], index: 1, kind: input, shape index: {}]
  %s2 = inlined_call_operand.vmem [shape: bf16[8,72], index: 2, kind: input, shape index: {}]
  %s3 = inlined_call_operand.vmem [shape: bf16[2,8,256], index: 3, kind: output, shape index: {0}]
  %s4 = inlined_call_operand.vmem [shape: f32[2,16,128], index: 4, kind: output, shape index: {1}]
  %5 = xla_tuple %s3, %s4
  %s6 = sld [smem:[#allocation0]]
  $region53: #{_lambda_.2} parent=0
    _
  %s8 = ssub.s32 1, %s6
  %s9 = scalar_select 0, %s8, %s6
  loop: start=0, step=1, limit=4
  $region2: #{_lambda_.2} parent=0 // loop_pre_header
    _
  $region3: #{_lambda_.2} parent=0 // loop_header
    %s11 = sphi 0, %s15
    %p12 = scmp.ge.s32.totalorder %s11, 4
    %s21 = sphi 0, %s23
    %s24 = sphi 0, %s21
    %s25 = sphi 0, %s24
    %s41 = sphi 0, %s25
    %s45 = sphi 0, %s45
    %s47 = sphi 0, %s45
    %s48 = sphi 0, %s47
    %s62 = sphi 0, %s48
    %s66 = sphi 0, %s66
    %s68 = sphi 0, %s66
    %s69 = sphi 0, %s68
    %s83 = sphi 0, %s69
    %s89 = sphi 0, %s91
    %s92 = sphi 0, %s89
    %s93 = sphi 0, %s92
    %s109 = sphi 0, %s93
    %s115 = sphi 0, %s117
    %s118 = sphi 0, %s115
    %s119 = sphi 0, %s118
    %s135 = sphi 0, %s119
  $region4: #{_lambda_.2} parent=0 // loop_header_branch
    %14 = sbr.rel (%p12) target = $region8
  $region5: #{_lambda_.2} parent=0 // loop_body
    %s16 = ssub.s32 %s11, 1
    %s17 = ssub.s32 %s11, 2
    %s18 = sadd.s32 %s11, 1
    %s19 = ssub.s32 %s11, %s18
    %p20 = scmp.eq.s32.totalorder %s19, 0
    %s22 = sadd.s32 %s21, 1
    %s23 = scalar_select %p20, %s21, %s22
    %p26 = pneg %p20
    %p27 = scmp.eq.s32.totalorder %s11, 1
    %p28 = por %p26, %p27
    %p29 = scmp.ne.s32.totalorder %s21, %s24
    %p30 = scmp.eq.s32.totalorder %s11, 0
    %p31 = por %p29, %p30
    %p32 = scmp.ne.s32.totalorder %s21, %s24
    %p33 = scmp.eq.s32.totalorder %s16, 1
    %p34 = por %p32, %p33
    %p35 = scmp.ne.s32.totalorder %s24, %s25
    %p36 = scmp.eq.s32.totalorder %s16, 0
    %p37 = por %p35, %p36
    %p38 = scmp.ne.s32.totalorder %s24, %s25
    %p39 = scmp.eq.s32.totalorder %s17, 1
    %p40 = por %p38, %p39
    %p42 = scmp.ne.s32.totalorder %s25, %s41
    %p43 = scmp.eq.s32.totalorder %s17, 0
    %p44 = por %p42, %p43
    %s46 = sadd.s32 %s45, 1
    %p49 = scmp.eq.s32.totalorder %s11, 1
    %p50 = scmp.ne.s32.totalorder %s45, %s47
    %p51 = scmp.eq.s32.totalorder %s11, 0
    %p52 = por %p50, %p51
    %p53 = scmp.ne.s32.totalorder %s45, %s47
    %p54 = scmp.eq.s32.totalorder %s16, 1
    %p55 = por %p53, %p54
    %p56 = scmp.ne.s32.totalorder %s47, %s48
    %p57 = scmp.eq.s32.totalorder %s16, 0
    %p58 = por %p56, %p57
    %p59 = scmp.ne.s32.totalorder %s47, %s48
    %p60 = scmp.eq.s32.totalorder %s17, 1
    %p61 = por %p59, %p60
    %p63 = scmp.ne.s32.totalorder %s48, %s62
    %p64 = scmp.eq.s32.totalorder %s17, 0
    %p65 = por %p63, %p64
    %s67 = sadd.s32 %s66, 1
    %p70 = scmp.eq.s32.totalorder %s11, 1
    %p71 = scmp.ne.s32.totalorder %s66, %s68
    %p72 = scmp.eq.s32.totalorder %s11, 0
    %p73 = por %p71, %p72
    %p74 = scmp.ne.s32.totalorder %s66, %s68
    %p75 = scmp.eq.s32.totalorder %s16, 1
    %p76 = por %p74, %p75
    %p77 = scmp.ne.s32.totalorder %s68, %s69
    %p78 = scmp.eq.s32.totalorder %s16, 0
    %p79 = por %p77, %p78
    %p80 = scmp.ne.s32.totalorder %s68, %s69
    %p81 = scmp.eq.s32.totalorder %s17, 1
    %p82 = por %p80, %p81
    %p84 = scmp.ne.s32.totalorder %s69, %s83
    %p85 = scmp.eq.s32.totalorder %s17, 0
    %p86 = por %p84, %p85
    %s87 = ssub.s32 %s11, %s18
    %p88 = scmp.eq.s32.totalorder %s87, 0
    %s90 = sadd.s32 %s89, 1
    %s91 = scalar_select %p88, %s89, %s90
    %p94 = pneg %p88
    %p95 = scmp.eq.s32.totalorder %s11, 1
    %p96 = por %p94, %p95
    %p97 = scmp.ne.s32.totalorder %s89, %s92
    %p98 = scmp.eq.s32.totalorder %s11, 0
    %p99 = por %p97, %p98
    %p100 = scmp.ne.s32.totalorder %s89, %s92
    %p101 = scmp.eq.s32.totalorder %s16, 1
    %p102 = por %p100, %p101
    %p103 = scmp.ne.s32.totalorder %s92, %s93
    %p104 = scmp.eq.s32.totalorder %s16, 0
    %p105 = por %p103, %p104
    %p106 = scmp.ne.s32.totalorder %s92, %s93
    %p107 = scmp.eq.s32.totalorder %s17, 1
    %p108 = por %p106, %p107
    %p110 = scmp.ne.s32.totalorder %s93, %s109
    %p111 = scmp.eq.s32.totalorder %s17, 0
    %p112 = por %p110, %p111
    %s113 = ssub.s32 %s11, %s18
    %p114 = scmp.eq.s32.totalorder %s113, 0
    %s116 = sadd.s32 %s115, 1
    %s117 = scalar_select %p114, %s115, %s116
    %p120 = pneg %p114
    %p121 = scmp.eq.s32.totalorder %s11, 1
    %p122 = por %p120, %p121
    %p123 = scmp.ne.s32.totalorder %s115, %s118
    %p124 = scmp.eq.s32.totalorder %s11, 0
    %p125 = por %p123, %p124
    %p126 = scmp.ne.s32.totalorder %s115, %s118
    %p127 = scmp.eq.s32.totalorder %s16, 1
    %p128 = por %p126, %p127
    %p129 = scmp.ne.s32.totalorder %s118, %s119
    %p130 = scmp.eq.s32.totalorder %s16, 0
    %p131 = por %p129, %p130
    %p132 = scmp.ne.s32.totalorder %s118, %s119
    %p133 = scmp.eq.s32.totalorder %s17, 1
    %p134 = por %p132, %p133
    %p136 = scmp.ne.s32.totalorder %s119, %s135
    %p137 = scmp.eq.s32.totalorder %s17, 0
    %p138 = por %p136, %p137
    %p139 = scmp.le.s32.totalorder 1, %s11
    %p140 = scmp.lt.s32.totalorder %s11, 3
    %p141 = pnand %p139, %p140
    %p142 = pneg %p141
    // Predicated region
    $region9: #{_lambda_.2} parent=5 // pred_check
      _
    $region10: #{_lambda_.2} parent=5 // pred_check_branch
      %144 = sbr.rel (%p141) target = $region12
    $region11: #{_lambda_.2} parent=5 // pred_region
      %s145 = ssub.s32 %s11, 1
      // Predicated region
      $region13: #{_lambda_.2} parent=11 // pred_check
        %p146 = pneg %p58
      $region14: #{_lambda_.2} parent=11 // pred_check_branch
        %148 = sbr.rel (%p146) target = $region16
      $region15: #{_lambda_.2} parent=11 // pred_region
        _
      $region16: #{_lambda_.2} parent=11 // pred_fallthru
        _
      // Predicated region
      $region17: #{_lambda_.2} parent=11 // pred_check
        %p149 = pneg %p79
      $region18: #{_lambda_.2} parent=11 // pred_check_branch
        %151 = sbr.rel (%p149) target = $region20
      $region19: #{_lambda_.2} parent=11 // pred_region
        _
      $region20: #{_lambda_.2} parent=11 // pred_fallthru
        _
    $region12: #{_lambda_.2} parent=5 // pred_fallthru
      _
    %p152 = scmp.lt.s32.totalorder %s11, 2
    // Predicated region
    $region21: #{_lambda_.2} parent=5 // pred_check
      %p153 = pneg %p152
    $region22: #{_lambda_.2} parent=5 // pred_check_branch
      %155 = sbr.rel (%p153) target = $region24
    $region23: #{_lambda_.2} parent=5 // pred_region
      // Predicated region
      $region25: #{_lambda_.2} parent=23 // pred_check
        %p156 = pneg %p31
      $region26: #{_lambda_.2} parent=23 // pred_check_branch
        %158 = sbr.rel (%p156) target = $region28
      $region27: #{_lambda_.2} parent=23 // pred_region
        %p159 = scmp.lt.s32.totalorder %s11, 1
        %s160 = scalar_select %p159, %s11, 1
        %s161 = smul.addr %s160, 2
        %s162 = smul.addr %s161, 8
        %s163 = scalar_lea.vmem %s0, %s162
      $region28: #{_lambda_.2} parent=23 // pred_fallthru
        _
    $region24: #{_lambda_.2} parent=5 // pred_fallthru
      _
    %p164 = scmp.le.s32.totalorder 1, %s11
    %p165 = scmp.lt.s32.totalorder %s11, 3
    %p166 = pnand %p164, %p165
    %p167 = pneg %p166
    // Predicated region
    $region29: #{_lambda_.2} parent=5 // pred_check
      _
    $region30: #{_lambda_.2} parent=5 // pred_check_branch
      %169 = sbr.rel (%p166) target = $region32
    $region31: #{_lambda_.2} parent=5 // pred_region
      %s170 = ssub.s32 %s11, 1
      %p171 = scmp.lt.s32.totalorder %s16, 1
      %s172 = scalar_select %p171, %s16, 1
      %s173 = smul.addr %s172, 2
      %s174 = smul.addr %s173, 8
      %s175 = scalar_lea.vmem %s0, %s174
      %p176 = pneg %p37
      %p177 = pneg %p34
      %p178 = pneg %p58
      %p179 = pneg %p55
      %p180 = pneg %p79
      %p181 = pneg %p76
      %p182 = pneg %p105
      %p183 = pneg %p102
      %p184 = scmp.lt.s32.totalorder %s16, 1
      %s185 = scalar_select %p184, %s16, 1
      %s186 = smul.addr %s185, 2
      %s187 = smul.addr %s186, 4
      %s188 = scalar_lea.vmem %s3, %s187
      %p189 = pneg %p131
      %p190 = pneg %p128
      %p191 = scmp.lt.s32.totalorder %s16, 1
      %s192 = scalar_select %p191, %s16, 1
      %s193 = smul.addr %s192, 2
      %s194 = smul.addr %s193, 8
      %s195 = scalar_lea.vmem %s4, %s194
      %p196 = scmp.lt.s32.totalorder %s16, 1
      %s197 = scalar_select %p196, %s16, 1
      %s198 = smul.addr %s197, 2
      %s199 = smul.addr %s198, 8
      %s200 = scalar_lea.vmem %s0, %s199
      %p201 = scmp.lt.s32.totalorder %s16, 1
      %s202 = scalar_select %p201, %s16, 1
      %s203 = smul.addr %s202, 2
      %s204 = smul.addr %s203, 4
      %s205 = scalar_lea.vmem %s3, %s204
      %p206 = scmp.lt.s32.totalorder %s16, 1
      %s207 = scalar_select %p206, %s16, 1
      %s208 = smul.addr %s207, 2
      %s209 = smul.addr %s208, 8
      %s210 = scalar_lea.vmem %s4, %s209
      %v212 = vld [vmem:[%s1] sm:$0xff]
      %v213 = vld [vmem:[%s1 + $0x8] sm:$0xff]
      %v214 = vld [vmem:[%s1 + $0x10] sm:$0xff]
      %v215 = vld [vmem:[%s200] sm:$0xff]
      %v216 = vld [vmem:[%s200 + $0x8] sm:$0xff]
      %218 = vset.pattern.permute.xlu0 0
      %219 = vperm.xlu0 %218, %v212
      %v220 = vpop.permute.xlu0 %219
      %v222 = vmul.f32 %v215, %v220
      %v223 = vmul.f32 %v216, %v220
      %225 = vset.pattern.permute.xlu0 0
      %226 = vperm.xlu0 %225, %v213
      %v227 = vpop.permute.xlu0 %226
      %v229 = vadd.f32 %v222, %v227
      %v230 = vadd.f32 %v223, %v227
      %vm231 = vcmp.ge.f32.partialorder %v229, 0.0
      %vm232 = vcmp.ge.f32.partialorder %v230, 0.0
      %v233 = vmul.f32 %v229, 0.01
      %v234 = vmul.f32 %v230, 0.01
      %v235 = vsel %vm231, %v229, %v233
      %v236 = vsel %vm232, %v230, %v234
      %v237 = vlaneseq
      %v238 = vand.u32 %v237, 127
      %v239 = vadd.s32 %v238, 128
      %vm240 = vcmp.lt.s32.totalorder %v238, 0
      %v241 = vsub.s32 0, %v238
      %v242 = vsel %vm240, %v241, %v238
      %v243 = vshrl.u32 %v242, 4
      %v244 = vand.u32 %v242, 15
      %v245 = vsub.s32 0, %v244
      %v246 = vsel %vm240, %v245, %v244
      %vm247 = vcmp.lt.s32.totalorder %v239, 0
      %v248 = vsub.s32 0, %v239
      %v249 = vsel %vm247, %v248, %v239
      %v250 = vshrl.u32 %v249, 4
      %v251 = vand.u32 %v249, 15
      %v252 = vsub.s32 0, %v251
      %v253 = vsel %vm247, %v252, %v251
      %vm254 = vcmp.ne.s32.totalorder %v246, 0
      %vm255 = vcmp.ne.s32.totalorder %v253, 0
      %vm256 = vcmp.lt.s32.totalorder %v246, 0
      %vm257 = vcmp.lt.s32.totalorder %v253, 0
      %vm258 = vmand %vm256, %vm254
      %vm259 = vmand %vm257, %vm255
      %v260 = vadd.s32 %v246, 16
      %v261 = vadd.s32 %v253, 16
      %v262 = vsel %vm258, %v260, %v246
      %v263 = vsel %vm259, %v261, %v253
      %264 = vrot.lane.b32.xlu0 %v235, 17
      %v265 = vpop.permute.xlu0 %264
      %266 = vrot.lane.b32.xlu0 %v236, 17
      %v267 = vpop.permute.xlu0 %266
      %vm268 = vcmp.lt.s32.totalorder %v238, 17
      %v269 = vsel %vm268, %v265, %v267
      %v270 = vsel %vm268, %v267, %v265
      %vm271 = vcmp.ge.s32.totalorder %v238, 16
      %vm272 = vcmp.ge.s32.totalorder %v239, 16
      %vm273 = vcmp.ge.s32.totalorder %v262, 1
      %vm274 = vcmp.ge.s32.totalorder %v263, 1
      %vm275 = vmand %vm271, %vm273
      %vm276 = vmand %vm272, %vm274
      %v277 = vsel %vm275, 1, 0
      %v278 = vsel %vm276, 1, 0
      %vm279 = vcmp.eq.s32.totalorder %v277, 1
      %vm280 = vcmp.eq.s32.totalorder %v278, 1
      %v281 = vsel %vm279, %v270, 0.0
      %v282 = vsel %vm280, %v269, 0.0
      %283 = vrot.lane.b32.xlu0 %v235, 16
      %v284 = vpop.permute.xlu0 %283
      %285 = vrot.lane.b32.xlu0 %v236, 16
      %v286 = vpop.permute.xlu0 %285
      %vm287 = vcmp.lt.s32.totalorder %v238, 16
      %v288 = vsel %vm287, %v284, %v286
      %v289 = vsel %vm287, %v286, %v284
      %v290 = vsel %vm271, 1, 0
      %v291 = vsel %vm272, 1, 0
      %vm292 = vcmp.eq.s32.totalorder %v290, 1
      %vm293 = vcmp.eq.s32.totalorder %v291, 1
      %v294 = vsel %vm292, %v289, 0.0
      %v295 = vsel %vm293, %v288, 0.0
      %296 = vrot.lane.b32.xlu0 %v235, 15
      %v297 = vpop.permute.xlu0 %296
      %298 = vrot.lane.b32.xlu0 %v236, 15
      %v299 = vpop.permute.xlu0 %298
      %vm300 = vcmp.lt.s32.totalorder %v238, 15
      %v301 = vsel %vm300, %v297, %v299
      %v302 = vsel %vm300, %v299, %v297
      %vm303 = vcmp.lt.s32.totalorder %v262, 15
      %vm304 = vcmp.lt.s32.totalorder %v263, 15
      %vm305 = vmand %vm271, %vm303
      %vm306 = vmand %vm272, %vm304
      %v307 = vsel %vm305, 1, 0
      %v308 = vsel %vm306, 1, 0
      %vm309 = vcmp.eq.s32.totalorder %v307, 1
      %vm310 = vcmp.eq.s32.totalorder %v308, 1
      %v311 = vsel %vm309, %v302, 0.0
      %v312 = vsel %vm310, %v301, 0.0
      %313 = vrot.lane.b32.xlu0 %v235, 1
      %v314 = vpop.permute.xlu0 %313
      %315 = vrot.lane.b32.xlu0 %v236, 1
      %v316 = vpop.permute.xlu0 %315
      %vm317 = vcmp.lt.s32.totalorder %v238, 1
      %v318 = vsel %vm317, %v314, %v316
      %v319 = vsel %vm317, %v316, %v314
      %v320 = vsel %vm273, 1, 0
      %v321 = vsel %vm274, 1, 0
      %vm322 = vcmp.eq.s32.totalorder %v320, 1
      %vm323 = vcmp.eq.s32.totalorder %v321, 1
      %v324 = vsel %vm322, %v319, 0.0
      %v325 = vsel %vm323, %v318, 0.0
      %326 = vrot.lane.b32.xlu0 %v235, 127
      %v327 = vpop.permute.xlu0 %326
      %328 = vrot.lane.b32.xlu0 %v236, 127
      %v329 = vpop.permute.xlu0 %328
      %vm330 = vcmp.lt.s32.totalorder %v238, 127
      %v331 = vsel %vm330, %v327, %v329
      %v332 = vsel %vm330, %v329, %v327
      %v333 = vsel %vm303, 1, 0
      %v334 = vsel %vm304, 1, 0
      %vm335 = vcmp.eq.s32.totalorder %v333, 1
      %vm336 = vcmp.eq.s32.totalorder %v334, 1
      %v337 = vsel %vm335, %v331, 0.0
      %v338 = vsel %vm336, %v332, 0.0
      %339 = vrot.lane.b32.xlu0 %v235, 113
      %v340 = vpop.permute.xlu0 %339
      %341 = vrot.lane.b32.xlu0 %v236, 113
      %v342 = vpop.permute.xlu0 %341
      %vm343 = vcmp.lt.s32.totalorder %v238, 113
      %v344 = vsel %vm343, %v340, %v342
      %v345 = vsel %vm343, %v342, %v340
      %vm346 = vcmp.lt.s32.totalorder %v238, 240
      %vm347 = vcmp.lt.s32.totalorder %v239, 240
      %vm348 = vmand %vm346, %vm273
      %vm349 = vmand %vm347, %vm274
      %v350 = vsel %vm348, 1, 0
      %v351 = vsel %vm349, 1, 0
      %vm352 = vcmp.eq.s32.totalorder %v350, 1
      %vm353 = vcmp.eq.s32.totalorder %v351, 1
      %v354 = vsel %vm352, %v344, 0.0
      %v355 = vsel %vm353, %v345, 0.0
      %356 = vrot.lane.b32.xlu0 %v235, 112
      %v357 = vpop.permute.xlu0 %356
      %358 = vrot.lane.b32.xlu0 %v236, 112
      %v359 = vpop.permute.xlu0 %358
      %vm360 = vcmp.lt.s32.totalorder %v238, 112
      %v361 = vsel %vm360, %v357, %v359
      %v362 = vsel %vm360, %v359, %v357
      %v363 = vsel %vm346, 1, 0
      %v364 = vsel %vm347, 1, 0
      %vm365 = vcmp.eq.s32.totalorder %v363, 1
      %vm366 = vcmp.eq.s32.totalorder %v364, 1
      %v367 = vsel %vm365, %v361, 0.0
      %v368 = vsel %vm366, %v362, 0.0
      %369 = vrot.lane.b32.xlu0 %v235, 111
      %v370 = vpop.permute.xlu0 %369
      %371 = vrot.lane.b32.xlu0 %v236, 111
      %v372 = vpop.permute.xlu0 %371
      %vm373 = vcmp.lt.s32.totalorder %v238, 111
      %v374 = vsel %vm373, %v370, %v372
      %v375 = vsel %vm373, %v372, %v370
      %vm376 = vmand %vm346, %vm303
      %vm377 = vmand %vm347, %vm304
      %v378 = vsel %vm376, 1, 0
      %v379 = vsel %vm377, 1, 0
      %vm380 = vcmp.eq.s32.totalorder %v378, 1
      %vm381 = vcmp.eq.s32.totalorder %v379, 1
      %v382 = vsel %vm380, %v374, 0.0
      %v383 = vsel %vm381, %v375, 0.0
      %v384 = vpack.c.bf16 %v294, %v281
      %v385 = vpack.c.bf16 %v295, %v282
      %v386 = vpack.c.bf16 %v324, %v311
      %v387 = vpack.c.bf16 %v325, %v312
      %v388 = vpack.c.bf16 %v337, %v235
      %v389 = vpack.c.bf16 %v338, %v236
      %v390 = vpack.c.bf16 %v367, %v354
      %v391 = vpack.c.bf16 %v368, %v355
      %v392 = vpack.c.bf16 %v382, %v382
      %v393 = vpack.c.bf16 %v383, %v383
      %v394 = vld [vmem:[%s2] sm:$0xf]
      %396 = vset.pattern.permute.xlu0 0
      %397 = vperm.xlu0 %396, %v214
      %v398 = vpop.permute.xlu0 %397
      %vm400 = vcmask 588800
      %v402 = vsel %vm400, %v394, 0
      %vm404 = vcmask 1043456
      %v406 = vsel %vm404, %v392, 0
      %v409 = vsel %vm404, %v393, 0
      %411 = vmatpush.bf16.msra.mxu0 0
      %412 = vmatpush.bf16.msra.mxu0 0
      %413 = vmatpush.bf16.msra.mxu0 0
      %414 = vmatpush.bf16.msra.mxu0 %v406
      %415 = vmatpush.bf16.msra.mxu0 %v390
      %416 = vmatpush.bf16.msra.mxu0 %v388
      %417 = vmatpush.bf16.msra.mxu0 %v386
      %418 = vmatpush.bf16.msra.mxu0 %v384
      %419 = vmatmul.bf16.gmra.mxu0 %v402
      %v420 = vpop.f32.mrf.mxu0
      %v421 = vadd.f32 %v398, %v420
      %v422 = vpop.f32.mrf.mxu0
      %423 = vdwg.mxu0
      %424 = vmatpush.bf16.msra.mxu0 0
      %425 = vmatpush.bf16.msra.mxu0 0
      %426 = vmatpush.bf16.msra.mxu0 0
      %427 = vmatpush.bf16.msra.mxu0 %v409
      %428 = vmatpush.bf16.msra.mxu0 %v391
      %429 = vmatpush.bf16.msra.mxu0 %v389
      %430 = vmatpush.bf16.msra.mxu0 %v387
      %431 = vmatpush.bf16.msra.mxu0 %v385
      %432 = vmatmul.bf16.gmra.mxu0 %v402
      %v433 = vpop.f32.mrf.mxu0
      %v434 = vadd.f32 %v398, %v433
      %v435 = vpop.f32.mrf.mxu0
      %436 = vdwg.mxu0
      %v437 = vpack.c.bf16 %v434, %v421
      %438 = vst [vmem:[%s205] sm:$0xff] %v437
      %v439 = vmul.f32 %v421, %v421
      %v440 = vadd.f32 %v421, %v434
      %v441 = vmul.f32 %v434, %v434
      %v442 = vadd.f32 %v439, %v441
      %443 = vst [vmem:[%s210] sm:$0xff] %v440
      %444 = vst [vmem:[%s210 + $0x8] sm:$0xff] %v442
      %p445 = scmp.lt.s32.totalorder %s16, 1
      %s446 = scalar_select %p445, %s16, 1
      %s447 = smul.addr %s446, 2
      %s448 = smul.addr %s447, 4
      %s449 = scalar_lea.vmem %s3, %s448
      %p450 = scmp.lt.s32.totalorder %s16, 1
      %s451 = scalar_select %p450, %s16, 1
      %s452 = smul.addr %s451, 2
      %s453 = smul.addr %s452, 8
      %s454 = scalar_lea.vmem %s4, %s453
      // Predicated region
      $region33: #{_lambda_.2} parent=31 // pred_check
        %p455 = pneg %p102
      $region34: #{_lambda_.2} parent=31 // pred_check_branch
        %457 = sbr.rel (%p455) target = $region36
      $region35: #{_lambda_.2} parent=31 // pred_region
        _
      $region36: #{_lambda_.2} parent=31 // pred_fallthru
        _
      // Predicated region
      $region37: #{_lambda_.2} parent=31 // pred_check
        %p458 = pneg %p128
      $region38: #{_lambda_.2} parent=31 // pred_check_branch
        %460 = sbr.rel (%p458) target = $region40
      $region39: #{_lambda_.2} parent=31 // pred_region
        _
      $region40: #{_lambda_.2} parent=31 // pred_fallthru
        _
    $region32: #{_lambda_.2} parent=5 // pred_fallthru
      _
    %p461 = scmp.le.s32.totalorder 2, %s11
    // Predicated region
    $region41: #{_lambda_.2} parent=5 // pred_check
      %p462 = pneg %p461
    $region42: #{_lambda_.2} parent=5 // pred_check_branch
      %464 = sbr.rel (%p462) target = $region44
    $region43: #{_lambda_.2} parent=5 // pred_region
      %s465 = ssub.s32 %s11, 2
      // Predicated region
      $region45: #{_lambda_.2} parent=43 // pred_check
        %p466 = pneg %p108
      $region46: #{_lambda_.2} parent=43 // pred_check_branch
        %468 = sbr.rel (%p466) target = $region48
      $region47: #{_lambda_.2} parent=43 // pred_region
        %p469 = scmp.lt.s32.totalorder %s17, 1
        %s470 = scalar_select %p469, %s17, 1
        %s471 = smul.addr %s470, 2
        %s472 = smul.addr %s471, 4
        %s473 = scalar_lea.vmem %s3, %s472
      $region48: #{_lambda_.2} parent=43 // pred_fallthru
        _
      // Predicated region
      $region49: #{_lambda_.2} parent=43 // pred_check
        %p474 = pneg %p134
      $region50: #{_lambda_.2} parent=43 // pred_check_branch
        %476 = sbr.rel (%p474) target = $region52
      $region51: #{_lambda_.2} parent=43 // pred_region
        %p477 = scmp.lt.s32.totalorder %s17, 1
        %s478 = scalar_select %p477, %s17, 1
        %s479 = smul.addr %s478, 2
        %s480 = smul.addr %s479, 8
        %s481 = scalar_lea.vmem %s4, %s480
      $region52: #{_lambda_.2} parent=43 // pred_fallthru
        _
    $region44: #{_lambda_.2} parent=5 // pred_fallthru
      _
  $region6: #{_lambda_.2} parent=0 // loop_footer
    %s15 = sadd.s32 1, %s11
  $region7: #{_lambda_.2} parent=0 // loop_footer_branch
    %10 = sbr.rel target = $region3
  $region8: #{_lambda_.2} parent=0 // loop_exit
    _

</llo_original>
